<compile_context>
chip_gen: v7x
topology: tpu7x:2x2x1
jax: 0.10.0
libtpu: 0.0.40
codegen_flags: <defaults>
</compile_context>

<pallas_src>
import functools

import jax
import jax.numpy as jnp
from jax import lax
from jax.experimental import pallas as pl
from jax.experimental.pallas import tpu as pltpu


def _resblock_kernel(x_ref, w1_ref, w2_ref, mask_ref, o_ref, patches_ref,
                     *, C, W, HW, Nb):
    """One block of Nb images per grid step.

    x_ref       : (Nb, C, HW)    f32 input block (channels on sublanes, pixels on lanes)
    w1_ref/w2   : (2C, 9C+1)     bf16 packed conv weights; last column is the bias
    mask_ref    : (9C, HW)       f32 per-tap boundary masks, pre-broadcast to C sublanes
    o_ref       : (Nb, C, HW)    f32 output block
    patches_ref : (9C+1, Nb*HW)  f32 im2col scratch; row 9C is the all-ones bias row
    """
    NLANE = Nb * HW
    shifts = [dh * W + dw for dh in (-1, 0, 1) for dw in (-1, 0, 1)]

    # Hoisted tap masks: loaded once, reused by both convs (center tap unused).
    mvals = [mask_ref[t * C:(t + 1) * C, :] for t in range(9)]

    # All-ones bias row of the im2col operand (folded-bias trick).  Written every
    # grid step because the scratch is per-core under megacore sharding.
    patches_ref[pl.ds(9 * C, 1), :] = jnp.ones((1, NLANE), jnp.float32)

    def conv3x3_mfm(imgs, w_ref_cur):
        # imgs: list of Nb (C, HW) f32 arrays.  Build the (9C+1, Nb*HW) im2col
        # operand with lane rolls (XLU) + boundary-mask multiplies (VPU); every
        # store is an aligned whole-vreg f32 store (C % 8 == 0, HW % 128 == 0).
        for i in range(Nb):
            img = imgs[i]
            for t, s in enumerate(shifts):
                if s == 0:
                    val = img
                else:
                    val = pltpu.roll(img, (-s) % HW, 1) * mvals[t]
                patches_ref[t * C:(t + 1) * C, i * HW:(i + 1) * HW] = val
        # One MXU matmul per conv: bf16 operands, f32 accumulation; the bias comes
        # along for free through the ones row / bias column.
        acc = jnp.dot(w_ref_cur[...], patches_ref[...].astype(jnp.bfloat16),
                      preferred_element_type=jnp.float32)        # (2C, Nb*HW)
        return jnp.maximum(acc[:C, :], acc[C:, :])               # MFM split max

    x_imgs = [x_ref[i] for i in range(Nb)]                       # each (C, HW) f32
    mid = conv3x3_mfm(x_imgs, w1_ref)                            # mfm1 stays on-chip
    mid_imgs = [mid[:, i * HW:(i + 1) * HW] for i in range(Nb)]
    out = conv3x3_mfm(mid_imgs, w2_ref)                          # mfm2
    for i in range(Nb):
        o_ref[i] = (out[:, i * HW:(i + 1) * HW] + x_imgs[i]).astype(o_ref.dtype)


def resblock_forward(x_nchw, params):
    """Pallas implementation of resblock.forward.  x_nchw: (N, C, H, W) f32."""
    w1, b1, w2, b2 = params                  # w*: (2C, C, 3, 3) OIHW, b*: (2C,)
    N, C, H, W = x_nchw.shape
    HW = H * W

    # resblock requires in_channels == out_channels (residual add) and 3x3/pad1.
    assert w1.shape == (2 * C, C, 3, 3) and w2.shape == (2 * C, C, 3, 3)
    assert b1.shape == (2 * C,) and b2.shape == (2 * C,)

    x_flat = x_nchw.reshape(N, C, HW)        # free reshape; no transpose / pad

    def pack_w(w, b):                        # OIHW -> (2C, 9C+1); last col = bias
        wp = jnp.transpose(w, (0, 2, 3, 1)).reshape(2 * C, 9 * C)
        return jnp.concatenate([wp, b.reshape(2 * C, 1)], axis=1).astype(jnp.bfloat16)

    w1p, w2p = pack_w(w1, b1), pack_w(w2, b2)

    # Per-tap validity masks over flattened pixels (encode the zero padding and
    # kill row wrap-around of flat lane rolls), pre-broadcast to C sublanes so the
    # kernel only does plain aligned loads.
    hh = jnp.arange(H).reshape(H, 1)
    ww = jnp.arange(W).reshape(1, W)
    rows = []
    for dh in (-1, 0, 1):
        for dw in (-1, 0, 1):
            ok = ((hh + dh >= 0) & (hh + dh < H) &
                  (ww + dw >= 0) & (ww + dw < W))
            rows.append(ok.reshape(HW))
    mask_img = jnp.stack(rows, axis=0).astype(jnp.float32)         # (9, HW)
    mask_bc = jnp.repeat(mask_img, C, axis=0)                      # (9C, HW)

    # Blocking: Nb images per grid step (fat matmul RHS, amortized weight pushes
    # and step overhead) while keeping 2 grid steps when N allows so both v7x
    # TensorCores are used; single-TC chips only pay one extra tiny step.
    if N >= 2 and N % 2 == 0:
        n_steps, Nb = 2, N // 2
    else:
        n_steps, Nb = N, 1

    kernel = functools.partial(_resblock_kernel, C=C, W=W, HW=HW, Nb=Nb)

    flops = 4 * (2 * C) * (9 * C + 1) * N * HW                     # 2 convs, 2 flops/MAC
    bytes_accessed = (2 * x_flat.size * 4                          # input + output (f32)
                      + (w1p.size + w2p.size) * 2                  # bf16 weights
                      + mask_bc.size * 4)                          # f32 masks

    out_flat = pl.pallas_call(
        kernel,
        out_shape=jax.ShapeDtypeStruct((N, C, HW), x_nchw.dtype),
        grid_spec=pltpu.PrefetchScalarGridSpec(
            num_scalar_prefetch=0,
            grid=(n_steps,),
            in_specs=[
                pl.BlockSpec((Nb, C, HW), lambda g: (g, 0, 0)),
                pl.BlockSpec((2 * C, 9 * C + 1), lambda g: (0, 0)),
                pl.BlockSpec((2 * C, 9 * C + 1), lambda g: (0, 0)),
                pl.BlockSpec((9 * C, HW), lambda g: (0, 0)),
            ],
            out_specs=pl.BlockSpec((Nb, C, HW), lambda g: (g, 0, 0)),
            scratch_shapes=[pltpu.VMEM((9 * C + 1, Nb * HW), jnp.float32)],
        ),
        compiler_params=pltpu.CompilerParams(
            dimension_semantics=("parallel",),
        ),
        cost_estimate=pl.CostEstimate(
            flops=int(flops), transcendentals=0,
            bytes_accessed=int(bytes_accessed)),
    )(x_flat, w1p, w2p, mask_bc)

    return out_flat.reshape(N, C, H, W)


def resblock_reference(x_nchw, params):
    """Pure-JAX reference (matches the PyTorch module, f32 throughout)."""
    w1, b1, w2, b2 = params

    def mfm(x, w, b):
        y = lax.conv_general_dilated(
            x, w, window_strides=(1, 1), padding=((1, 1), (1, 1)),
            dimension_numbers=("NCHW", "OIHW", "NCHW"))
        y = y + b[None, :, None, None]
        c = y.shape[1] // 2
        return jnp.maximum(y[:, :c], y[:, c:])

    out = mfm(x_nchw, w1, b1)
    out = mfm(out, w2, b2)
    return out + x_nchw


def init_params(key, channels):
    """Deterministic synthetic init (shapes match nn.Conv2d(C, 2C, 3, 1, 1))."""
    k1, k2, k3, k4 = jax.random.split(key, 4)
    scale = 0.1
    w1 = scale * jax.random.normal(k1, (2 * channels, channels, 3, 3), jnp.float32)
    b1 = scale * jax.random.normal(k2, (2 * channels,), jnp.float32)
    w2 = scale * jax.random.normal(k3, (2 * channels, channels, 3, 3), jnp.float32)
    b2 = scale * jax.random.normal(k4, (2 * channels,), jnp.float32)
    return (w1, b1, w2, b2)


if __name__ == "__main__":
    key = jax.random.PRNGKey(0)
    kx, kp = jax.random.split(key)

    N, C, H, W = 4, 8, 16, 16          # resblock requires in_channels == out_channels
    x = jax.random.normal(kx, (N, C, H, W), jnp.float32)
    params = init_params(kp, C)

    out = jax.jit(resblock_forward)(x, params)
    out = jax.block_until_ready(out)

    ref = resblock_reference(x, params)
    assert out.shape == (N, C, H, W)
    # bf16 MXU operands (f32 accumulation) -> slightly looser tolerance than pure f32.
    assert jnp.allclose(out, ref, atol=5e-2, rtol=5e-2), "mismatch vs reference"

    print("KERNEL_OK")
</pallas_src>

<mosaic_0001>
module attributes {stable_mosaic.version = 11 : i64} {
  func.func @_resblock_kernel(%arg0: i32, %arg1: memref<2x8x256xf32, #tpu.memory_space<vmem>>, %arg2: memref<16x73xbf16, #tpu.memory_space<vmem>>, %arg3: memref<16x73xbf16, #tpu.memory_space<vmem>>, %arg4: memref<72x256xf32, #tpu.memory_space<vmem>>, %arg5: memref<2x8x256xf32, #tpu.memory_space<vmem>>, %arg6: memref<73x512xf32, #tpu.memory_space<vmem>>) attributes {dimension_semantics = [#tpu.dimension_semantics<parallel>], iteration_bounds = array<i64: 2>, scalar_prefetch = 0 : i64, scratch_operands = 1 : i64, tpu.core_type = #tpu.core_type<tc>, window_params = [{transform_indices = @transform_0, window_bounds = array<i64: 2, 8, 256>}, {pipeline_mode = #tpu.pipeline_mode<synchronous>, transform_indices = @transform_1, window_bounds = array<i64: 16, 73>}, {pipeline_mode = #tpu.pipeline_mode<synchronous>, transform_indices = @transform_2, window_bounds = array<i64: 16, 73>}, {pipeline_mode = #tpu.pipeline_mode<synchronous>, transform_indices = @transform_3, window_bounds = array<i64: 72, 256>}, {transform_indices = @transform_4, window_bounds = array<i64: 2, 8, 256>}]} {
    %c0 = arith.constant 0 : index
    %c0_0 = arith.constant 0 : index
    %0 = vector.load %arg4[%c0, %c0_0] : memref<72x256xf32, #tpu.memory_space<vmem>>, vector<8x256xf32>
    %c8 = arith.constant 8 : index
    %c0_1 = arith.constant 0 : index
    %1 = vector.load %arg4[%c8, %c0_1] : memref<72x256xf32, #tpu.memory_space<vmem>>, vector<8x256xf32>
    %c16 = arith.constant 16 : index
    %c0_2 = arith.constant 0 : index
    %2 = vector.load %arg4[%c16, %c0_2] : memref<72x256xf32, #tpu.memory_space<vmem>>, vector<8x256xf32>
    %c24 = arith.constant 24 : index
    %c0_3 = arith.constant 0 : index
    %3 = vector.load %arg4[%c24, %c0_3] : memref<72x256xf32, #tpu.memory_space<vmem>>, vector<8x256xf32>
    %c40 = arith.constant 40 : index
    %c0_4 = arith.constant 0 : index
    %4 = vector.load %arg4[%c40, %c0_4] : memref<72x256xf32, #tpu.memory_space<vmem>>, vector<8x256xf32>
    %c48 = arith.constant 48 : index
    %c0_5 = arith.constant 0 : index
    %5 = vector.load %arg4[%c48, %c0_5] : memref<72x256xf32, #tpu.memory_space<vmem>>, vector<8x256xf32>
    %c56 = arith.constant 56 : index
    %c0_6 = arith.constant 0 : index
    %6 = vector.load %arg4[%c56, %c0_6] : memref<72x256xf32, #tpu.memory_space<vmem>>, vector<8x256xf32>
    %c64 = arith.constant 64 : index
    %c0_7 = arith.constant 0 : index
    %7 = vector.load %arg4[%c64, %c0_7] : memref<72x256xf32, #tpu.memory_space<vmem>>, vector<8x256xf32>
    %cst = arith.constant 1.000000e+00 : f32
    %8 = vector.broadcast %cst : f32 to vector<1x512xf32>
    %c72 = arith.constant 72 : index
    %c0_8 = arith.constant 0 : index
    %9 = vector.load %arg6[%c72, %c0_8] : memref<73x512xf32, #tpu.memory_space<vmem>>, vector<1x512xf32>
    tpu.vector_store %arg6[%c72, %c0_8], %8 {strides = array<i32>} : memref<73x512xf32, #tpu.memory_space<vmem>>, vector<1x512xf32>,
    %c0_9 = arith.constant 0 : index
    %c0_10 = arith.constant 0 : index
    %c0_11 = arith.constant 0 : index
    %10 = vector.load %arg1[%c0_9, %c0_10, %c0_11] : memref<2x8x256xf32, #tpu.memory_space<vmem>>, vector<1x8x256xf32>
    %11 = vector.shape_cast %10 : vector<1x8x256xf32> to vector<8x256xf32>
    %c1 = arith.constant 1 : index
    %c0_12 = arith.constant 0 : index
    %c0_13 = arith.constant 0 : index
    %12 = vector.load %arg1[%c1, %c0_12, %c0_13] : memref<2x8x256xf32, #tpu.memory_space<vmem>>, vector<1x8x256xf32>
    %13 = vector.shape_cast %12 : vector<1x8x256xf32> to vector<8x256xf32>
    %c17_i32 = arith.constant 17 : i32
    %14 = tpu.dynamic_rotate %11 by %c17_i32 dim 1 : vector<8x256xf32>, i32 -> vector<8x256xf32>
    %15 = arith.mulf %14, %0 : vector<8x256xf32>
    %c0_14 = arith.constant 0 : index
    %c0_15 = arith.constant 0 : index
    %16 = vector.load %arg6[%c0_14, %c0_15] : memref<73x512xf32, #tpu.memory_space<vmem>>, vector<8x256xf32>
    tpu.vector_store %arg6[%c0_14, %c0_15], %15 {strides = array<i32>} : memref<73x512xf32, #tpu.memory_space<vmem>>, vector<8x256xf32>,
    %c16_i32 = arith.constant 16 : i32
    %17 = tpu.dynamic_rotate %11 by %c16_i32 dim 1 : vector<8x256xf32>, i32 -> vector<8x256xf32>
    %18 = arith.mulf %17, %1 : vector<8x256xf32>
    %c8_16 = arith.constant 8 : index
    %c0_17 = arith.constant 0 : index
    %19 = vector.load %arg6[%c8_16, %c0_17] : memref<73x512xf32, #tpu.memory_space<vmem>>, vector<8x256xf32>
    tpu.vector_store %arg6[%c8_16, %c0_17], %18 {strides = array<i32>} : memref<73x512xf32, #tpu.memory_space<vmem>>, vector<8x256xf32>,
    %c15_i32 = arith.constant 15 : i32
    %20 = tpu.dynamic_rotate %11 by %c15_i32 dim 1 : vector<8x256xf32>, i32 -> vector<8x256xf32>
    %21 = arith.mulf %20, %2 : vector<8x256xf32>
    %c16_18 = arith.constant 16 : index
    %c0_19 = arith.constant 0 : index
    %22 = vector.load %arg6[%c16_18, %c0_19] : memref<73x512xf32, #tpu.memory_space<vmem>>, vector<8x256xf32>
    tpu.vector_store %arg6[%c16_18, %c0_19], %21 {strides = array<i32>} : memref<73x512xf32, #tpu.memory_space<vmem>>, vector<8x256xf32>,
    %c1_i32 = arith.constant 1 : i32
    %23 = tpu.dynamic_rotate %11 by %c1_i32 dim 1 : vector<8x256xf32>, i32 -> vector<8x256xf32>
    %24 = arith.mulf %23, %3 : vector<8x256xf32>
    %c24_20 = arith.constant 24 : index
    %c0_21 = arith.constant 0 : index
    %25 = vector.load %arg6[%c24_20, %c0_21] : memref<73x512xf32, #tpu.memory_space<vmem>>, vector<8x256xf32>
    tpu.vector_store %arg6[%c24_20, %c0_21], %24 {strides = array<i32>} : memref<73x512xf32, #tpu.memory_space<vmem>>, vector<8x256xf32>,
    %c32 = arith.constant 32 : index
    %c0_22 = arith.constant 0 : index
    %26 = vector.load %arg6[%c32, %c0_22] : memref<73x512xf32, #tpu.memory_space<vmem>>, vector<8x256xf32>
    tpu.vector_store %arg6[%c32, %c0_22], %11 {strides = array<i32>} : memref<73x512xf32, #tpu.memory_space<vmem>>, vector<8x256xf32>,
    %c255_i32 = arith.constant 255 : i32
    %27 = tpu.dynamic_rotate %11 by %c255_i32 dim 1 : vector<8x256xf32>, i32 -> vector<8x256xf32>
    %28 = arith.mulf %27, %4 : vector<8x256xf32>
    %c40_23 = arith.constant 40 : index
    %c0_24 = arith.constant 0 : index
    %29 = vector.load %arg6[%c40_23, %c0_24] : memref<73x512xf32, #tpu.memory_space<vmem>>, vector<8x256xf32>
    tpu.vector_store %arg6[%c40_23, %c0_24], %28 {strides = array<i32>} : memref<73x512xf32, #tpu.memory_space<vmem>>, vector<8x256xf32>,
    %c241_i32 = arith.constant 241 : i32
    %30 = tpu.dynamic_rotate %11 by %c241_i32 dim 1 : vector<8x256xf32>, i32 -> vector<8x256xf32>
    %31 = arith.mulf %30, %5 : vector<8x256xf32>
    %c48_25 = arith.constant 48 : index
    %c0_26 = arith.constant 0 : index
    %32 = vector.load %arg6[%c48_25, %c0_26] : memref<73x512xf32, #tpu.memory_space<vmem>>, vector<8x256xf32>
    tpu.vector_store %arg6[%c48_25, %c0_26], %31 {strides = array<i32>} : memref<73x512xf32, #tpu.memory_space<vmem>>, vector<8x256xf32>,
    %c240_i32 = arith.constant 240 : i32
    %33 = tpu.dynamic_rotate %11 by %c240_i32 dim 1 : vector<8x256xf32>, i32 -> vector<8x256xf32>
    %34 = arith.mulf %33, %6 : vector<8x256xf32>
    %c56_27 = arith.constant 56 : index
    %c0_28 = arith.constant 0 : index
    %35 = vector.load %arg6[%c56_27, %c0_28] : memref<73x512xf32, #tpu.memory_space<vmem>>, vector<8x256xf32>
    tpu.vector_store %arg6[%c56_27, %c0_28], %34 {strides = array<i32>} : memref<73x512xf32, #tpu.memory_space<vmem>>, vector<8x256xf32>,
    %c239_i32 = arith.constant 239 : i32
    %36 = tpu.dynamic_rotate %11 by %c239_i32 dim 1 : vector<8x256xf32>, i32 -> vector<8x256xf32>
    %37 = arith.mulf %36, %7 : vector<8x256xf32>
    %c64_29 = arith.constant 64 : index
    %c0_30 = arith.constant 0 : index
    %38 = vector.load %arg6[%c64_29, %c0_30] : memref<73x512xf32, #tpu.memory_space<vmem>>, vector<8x256xf32>
    tpu.vector_store %arg6[%c64_29, %c0_30], %37 {strides = array<i32>} : memref<73x512xf32, #tpu.memory_space<vmem>>, vector<8x256xf32>,
    %c17_i32_31 = arith.constant 17 : i32
    %39 = tpu.dynamic_rotate %13 by %c17_i32_31 dim 1 : vector<8x256xf32>, i32 -> vector<8x256xf32>
    %40 = arith.mulf %39, %0 : vector<8x256xf32>
    %c0_32 = arith.constant 0 : index
    %c256 = arith.constant 256 : index
    %41 = vector.load %arg6[%c0_32, %c256] : memref<73x512xf32, #tpu.memory_space<vmem>>, vector<8x256xf32>
    tpu.vector_store %arg6[%c0_32, %c256], %40 {strides = array<i32>} : memref<73x512xf32, #tpu.memory_space<vmem>>, vector<8x256xf32>,
    %c16_i32_33 = arith.constant 16 : i32
    %42 = tpu.dynamic_rotate %13 by %c16_i32_33 dim 1 : vector<8x256xf32>, i32 -> vector<8x256xf32>
    %43 = arith.mulf %42, %1 : vector<8x256xf32>
    %c8_34 = arith.constant 8 : index
    %c256_35 = arith.constant 256 : index
    %44 = vector.load %arg6[%c8_34, %c256_35] : memref<73x512xf32, #tpu.memory_space<vmem>>, vector<8x256xf32>
    tpu.vector_store %arg6[%c8_34, %c256_35], %43 {strides = array<i32>} : memref<73x512xf32, #tpu.memory_space<vmem>>, vector<8x256xf32>,
    %c15_i32_36 = arith.constant 15 : i32
    %45 = tpu.dynamic_rotate %13 by %c15_i32_36 dim 1 : vector<8x256xf32>, i32 -> vector<8x256xf32>
    %46 = arith.mulf %45, %2 : vector<8x256xf32>
    %c16_37 = arith.constant 16 : index
    %c256_38 = arith.constant 256 : index
    %47 = vector.load %arg6[%c16_37, %c256_38] : memref<73x512xf32, #tpu.memory_space<vmem>>, vector<8x256xf32>
    tpu.vector_store %arg6[%c16_37, %c256_38], %46 {strides = array<i32>} : memref<73x512xf32, #tpu.memory_space<vmem>>, vector<8x256xf32>,
    %c1_i32_39 = arith.constant 1 : i32
    %48 = tpu.dynamic_rotate %13 by %c1_i32_39 dim 1 : vector<8x256xf32>, i32 -> vector<8x256xf32>
    %49 = arith.mulf %48, %3 : vector<8x256xf32>
    %c24_40 = arith.constant 24 : index
    %c256_41 = arith.constant 256 : index
    %50 = vector.load %arg6[%c24_40, %c256_41] : memref<73x512xf32, #tpu.memory_space<vmem>>, vector<8x256xf32>
    tpu.vector_store %arg6[%c24_40, %c256_41], %49 {strides = array<i32>} : memref<73x512xf32, #tpu.memory_space<vmem>>, vector<8x256xf32>,
    %c32_42 = arith.constant 32 : index
    %c256_43 = arith.constant 256 : index
    %51 = vector.load %arg6[%c32_42, %c256_43] : memref<73x512xf32, #tpu.memory_space<vmem>>, vector<8x256xf32>
    tpu.vector_store %arg6[%c32_42, %c256_43], %13 {strides = array<i32>} : memref<73x512xf32, #tpu.memory_space<vmem>>, vector<8x256xf32>,
    %c255_i32_44 = arith.constant 255 : i32
    %52 = tpu.dynamic_rotate %13 by %c255_i32_44 dim 1 : vector<8x256xf32>, i32 -> vector<8x256xf32>
    %53 = arith.mulf %52, %4 : vector<8x256xf32>
    %c40_45 = arith.constant 40 : index
    %c256_46 = arith.constant 256 : index
    %54 = vector.load %arg6[%c40_45, %c256_46] : memref<73x512xf32, #tpu.memory_space<vmem>>, vector<8x256xf32>
    tpu.vector_store %arg6[%c40_45, %c256_46], %53 {strides = array<i32>} : memref<73x512xf32, #tpu.memory_space<vmem>>, vector<8x256xf32>,
    %c241_i32_47 = arith.constant 241 : i32
    %55 = tpu.dynamic_rotate %13 by %c241_i32_47 dim 1 : vector<8x256xf32>, i32 -> vector<8x256xf32>
    %56 = arith.mulf %55, %5 : vector<8x256xf32>
    %c48_48 = arith.constant 48 : index
    %c256_49 = arith.constant 256 : index
    %57 = vector.load %arg6[%c48_48, %c256_49] : memref<73x512xf32, #tpu.memory_space<vmem>>, vector<8x256xf32>
    tpu.vector_store %arg6[%c48_48, %c256_49], %56 {strides = array<i32>} : memref<73x512xf32, #tpu.memory_space<vmem>>, vector<8x256xf32>,
    %c240_i32_50 = arith.constant 240 : i32
    %58 = tpu.dynamic_rotate %13 by %c240_i32_50 dim 1 : vector<8x256xf32>, i32 -> vector<8x256xf32>
    %59 = arith.mulf %58, %6 : vector<8x256xf32>
    %c56_51 = arith.constant 56 : index
    %c256_52 = arith.constant 256 : index
    %60 = vector.load %arg6[%c56_51, %c256_52] : memref<73x512xf32, #tpu.memory_space<vmem>>, vector<8x256xf32>
    tpu.vector_store %arg6[%c56_51, %c256_52], %59 {strides = array<i32>} : memref<73x512xf32, #tpu.memory_space<vmem>>, vector<8x256xf32>,
    %c239_i32_53 = arith.constant 239 : i32
    %61 = tpu.dynamic_rotate %13 by %c239_i32_53 dim 1 : vector<8x256xf32>, i32 -> vector<8x256xf32>
    %62 = arith.mulf %61, %7 : vector<8x256xf32>
    %c64_54 = arith.constant 64 : index
    %c256_55 = arith.constant 256 : index
    %63 = vector.load %arg6[%c64_54, %c256_55] : memref<73x512xf32, #tpu.memory_space<vmem>>, vector<8x256xf32>
    tpu.vector_store %arg6[%c64_54, %c256_55], %62 {strides = array<i32>} : memref<73x512xf32, #tpu.memory_space<vmem>>, vector<8x256xf32>,
    %c0_56 = arith.constant 0 : index
    %c0_57 = arith.constant 0 : index
    %64 = vector.load %arg2[%c0_56, %c0_57] : memref<16x73xbf16, #tpu.memory_space<vmem>>, vector<16x73xbf16>
    %c0_58 = arith.constant 0 : index
    %c0_59 = arith.constant 0 : index
    %65 = vector.load %arg6[%c0_58, %c0_59] : memref<73x512xf32, #tpu.memory_space<vmem>>, vector<73x512xf32>
    %66 = arith.truncf %65 : vector<73x512xf32> to vector<73x512xbf16>
    %cst_60 = arith.constant dense<0.000000e+00> : vector<16x512xf32>
    %67 = tpu.matmul %64, %66, %cst_60 {dimension_numbers = #tpu.dot_dimension_numbers<[1], [0], [0], [1], [0, 0, 1, 1], [], []>} : vector<16x73xbf16>, vector<73x512xbf16>, vector<16x512xf32> -> vector<16x512xf32>
    %68 = vector.extract_strided_slice %67 {offsets = [0, 0], sizes = [8, 512], strides = [1, 1]} : vector<16x512xf32> to vector<8x512xf32>
    %69 = vector.extract_strided_slice %67 {offsets = [8, 0], sizes = [8, 512], strides = [1, 1]} : vector<16x512xf32> to vector<8x512xf32>
    %70 = arith.maximumf %68, %69 : vector<8x512xf32>
    %71 = vector.extract_strided_slice %70 {offsets = [0, 0], sizes = [8, 256], strides = [1, 1]} : vector<8x512xf32> to vector<8x256xf32>
    %72 = vector.extract_strided_slice %70 {offsets = [0, 256], sizes = [8, 256], strides = [1, 1]} : vector<8x512xf32> to vector<8x256xf32>
    %c17_i32_61 = arith.constant 17 : i32
    %73 = tpu.dynamic_rotate %71 by %c17_i32_61 dim 1 : vector<8x256xf32>, i32 -> vector<8x256xf32>
    %74 = arith.mulf %73, %0 : vector<8x256xf32>
    %c0_62 = arith.constant 0 : index
    %c0_63 = arith.constant 0 : index
    %75 = vector.load %arg6[%c0_62, %c0_63] : memref<73x512xf32, #tpu.memory_space<vmem>>, vector<8x256xf32>
    tpu.vector_store %arg6[%c0_62, %c0_63], %74 {strides = array<i32>} : memref<73x512xf32, #tpu.memory_space<vmem>>, vector<8x256xf32>,
    %c16_i32_64 = arith.constant 16 : i32
    %76 = tpu.dynamic_rotate %71 by %c16_i32_64 dim 1 : vector<8x256xf32>, i32 -> vector<8x256xf32>
    %77 = arith.mulf %76, %1 : vector<8x256xf32>
    %c8_65 = arith.constant 8 : index
    %c0_66 = arith.constant 0 : index
    %78 = vector.load %arg6[%c8_65, %c0_66] : memref<73x512xf32, #tpu.memory_space<vmem>>, vector<8x256xf32>
    tpu.vector_store %arg6[%c8_65, %c0_66], %77 {strides = array<i32>} : memref<73x512xf32, #tpu.memory_space<vmem>>, vector<8x256xf32>,
    %c15_i32_67 = arith.constant 15 : i32
    %79 = tpu.dynamic_rotate %71 by %c15_i32_67 dim 1 : vector<8x256xf32>, i32 -> vector<8x256xf32>
    %80 = arith.mulf %79, %2 : vector<8x256xf32>
    %c16_68 = arith.constant 16 : index
    %c0_69 = arith.constant 0 : index
    %81 = vector.load %arg6[%c16_68, %c0_69] : memref<73x512xf32, #tpu.memory_space<vmem>>, vector<8x256xf32>
    tpu.vector_store %arg6[%c16_68, %c0_69], %80 {strides = array<i32>} : memref<73x512xf32, #tpu.memory_space<vmem>>, vector<8x256xf32>,
    %c1_i32_70 = arith.constant 1 : i32
    %82 = tpu.dynamic_rotate %71 by %c1_i32_70 dim 1 : vector<8x256xf32>, i32 -> vector<8x256xf32>
    %83 = arith.mulf %82, %3 : vector<8x256xf32>
    %c24_71 = arith.constant 24 : index
    %c0_72 = arith.constant 0 : index
    %84 = vector.load %arg6[%c24_71, %c0_72] : memref<73x512xf32, #tpu.memory_space<vmem>>, vector<8x256xf32>
    tpu.vector_store %arg6[%c24_71, %c0_72], %83 {strides = array<i32>} : memref<73x512xf32, #tpu.memory_space<vmem>>, vector<8x256xf32>,
    %c32_73 = arith.constant 32 : index
    %c0_74 = arith.constant 0 : index
    %85 = vector.load %arg6[%c32_73, %c0_74] : memref<73x512xf32, #tpu.memory_space<vmem>>, vector<8x256xf32>
    tpu.vector_store %arg6[%c32_73, %c0_74], %71 {strides = array<i32>} : memref<73x512xf32, #tpu.memory_space<vmem>>, vector<8x256xf32>,
    %c255_i32_75 = arith.constant 255 : i32
    %86 = tpu.dynamic_rotate %71 by %c255_i32_75 dim 1 : vector<8x256xf32>, i32 -> vector<8x256xf32>
    %87 = arith.mulf %86, %4 : vector<8x256xf32>
    %c40_76 = arith.constant 40 : index
    %c0_77 = arith.constant 0 : index
    %88 = vector.load %arg6[%c40_76, %c0_77] : memref<73x512xf32, #tpu.memory_space<vmem>>, vector<8x256xf32>
    tpu.vector_store %arg6[%c40_76, %c0_77], %87 {strides = array<i32>} : memref<73x512xf32, #tpu.memory_space<vmem>>, vector<8x256xf32>,
    %c241_i32_78 = arith.constant 241 : i32
    %89 = tpu.dynamic_rotate %71 by %c241_i32_78 dim 1 : vector<8x256xf32>, i32 -> vector<8x256xf32>
    %90 = arith.mulf %89, %5 : vector<8x256xf32>
    %c48_79 = arith.constant 48 : index
    %c0_80 = arith.constant 0 : index
    %91 = vector.load %arg6[%c48_79, %c0_80] : memref<73x512xf32, #tpu.memory_space<vmem>>, vector<8x256xf32>
    tpu.vector_store %arg6[%c48_79, %c0_80], %90 {strides = array<i32>} : memref<73x512xf32, #tpu.memory_space<vmem>>, vector<8x256xf32>,
    %c240_i32_81 = arith.constant 240 : i32
    %92 = tpu.dynamic_rotate %71 by %c240_i32_81 dim 1 : vector<8x256xf32>, i32 -> vector<8x256xf32>
    %93 = arith.mulf %92, %6 : vector<8x256xf32>
    %c56_82 = arith.constant 56 : index
    %c0_83 = arith.constant 0 : index
    %94 = vector.load %arg6[%c56_82, %c0_83] : memref<73x512xf32, #tpu.memory_space<vmem>>, vector<8x256xf32>
    tpu.vector_store %arg6[%c56_82, %c0_83], %93 {strides = array<i32>} : memref<73x512xf32, #tpu.memory_space<vmem>>, vector<8x256xf32>,
    %c239_i32_84 = arith.constant 239 : i32
    %95 = tpu.dynamic_rotate %71 by %c239_i32_84 dim 1 : vector<8x256xf32>, i32 -> vector<8x256xf32>
    %96 = arith.mulf %95, %7 : vector<8x256xf32>
    %c64_85 = arith.constant 64 : index
    %c0_86 = arith.constant 0 : index
    %97 = vector.load %arg6[%c64_85, %c0_86] : memref<73x512xf32, #tpu.memory_space<vmem>>, vector<8x256xf32>
    tpu.vector_store %arg6[%c64_85, %c0_86], %96 {strides = array<i32>} : memref<73x512xf32, #tpu.memory_space<vmem>>, vector<8x256xf32>,
    %c17_i32_87 = arith.constant 17 : i32
    %98 = tpu.dynamic_rotate %72 by %c17_i32_87 dim 1 : vector<8x256xf32>, i32 -> vector<8x256xf32>
    %99 = arith.mulf %98, %0 : vector<8x256xf32>
    %c0_88 = arith.constant 0 : index
    %c256_89 = arith.constant 256 : index
    %100 = vector.load %arg6[%c0_88, %c256_89] : memref<73x512xf32, #tpu.memory_space<vmem>>, vector<8x256xf32>
    tpu.vector_store %arg6[%c0_88, %c256_89], %99 {strides = array<i32>} : memref<73x512xf32, #tpu.memory_space<vmem>>, vector<8x256xf32>,
    %c16_i32_90 = arith.constant 16 : i32
    %101 = tpu.dynamic_rotate %72 by %c16_i32_90 dim 1 : vector<8x256xf32>, i32 -> vector<8x256xf32>
    %102 = arith.mulf %101, %1 : vector<8x256xf32>
    %c8_91 = arith.constant 8 : index
    %c256_92 = arith.constant 256 : index
    %103 = vector.load %arg6[%c8_91, %c256_92] : memref<73x512xf32, #tpu.memory_space<vmem>>, vector<8x256xf32>
    tpu.vector_store %arg6[%c8_91, %c256_92], %102 {strides = array<i32>} : memref<73x512xf32, #tpu.memory_space<vmem>>, vector<8x256xf32>,
    %c15_i32_93 = arith.constant 15 : i32
    %104 = tpu.dynamic_rotate %72 by %c15_i32_93 dim 1 : vector<8x256xf32>, i32 -> vector<8x256xf32>
    %105 = arith.mulf %104, %2 : vector<8x256xf32>
    %c16_94 = arith.constant 16 : index
    %c256_95 = arith.constant 256 : index
    %106 = vector.load %arg6[%c16_94, %c256_95] : memref<73x512xf32, #tpu.memory_space<vmem>>, vector<8x256xf32>
    tpu.vector_store %arg6[%c16_94, %c256_95], %105 {strides = array<i32>} : memref<73x512xf32, #tpu.memory_space<vmem>>, vector<8x256xf32>,
    %c1_i32_96 = arith.constant 1 : i32
    %107 = tpu.dynamic_rotate %72 by %c1_i32_96 dim 1 : vector<8x256xf32>, i32 -> vector<8x256xf32>
    %108 = arith.mulf %107, %3 : vector<8x256xf32>
    %c24_97 = arith.constant 24 : index
    %c256_98 = arith.constant 256 : index
    %109 = vector.load %arg6[%c24_97, %c256_98] : memref<73x512xf32, #tpu.memory_space<vmem>>, vector<8x256xf32>
    tpu.vector_store %arg6[%c24_97, %c256_98], %108 {strides = array<i32>} : memref<73x512xf32, #tpu.memory_space<vmem>>, vector<8x256xf32>,
    %c32_99 = arith.constant 32 : index
    %c256_100 = arith.constant 256 : index
    %110 = vector.load %arg6[%c32_99, %c256_100] : memref<73x512xf32, #tpu.memory_space<vmem>>, vector<8x256xf32>
    tpu.vector_store %arg6[%c32_99, %c256_100], %72 {strides = array<i32>} : memref<73x512xf32, #tpu.memory_space<vmem>>, vector<8x256xf32>,
    %c255_i32_101 = arith.constant 255 : i32
    %111 = tpu.dynamic_rotate %72 by %c255_i32_101 dim 1 : vector<8x256xf32>, i32 -> vector<8x256xf32>
    %112 = arith.mulf %111, %4 : vector<8x256xf32>
    %c40_102 = arith.constant 40 : index
    %c256_103 = arith.constant 256 : index
    %113 = vector.load %arg6[%c40_102, %c256_103] : memref<73x512xf32, #tpu.memory_space<vmem>>, vector<8x256xf32>
    tpu.vector_store %arg6[%c40_102, %c256_103], %112 {strides = array<i32>} : memref<73x512xf32, #tpu.memory_space<vmem>>, vector<8x256xf32>,
    %c241_i32_104 = arith.constant 241 : i32
    %114 = tpu.dynamic_rotate %72 by %c241_i32_104 dim 1 : vector<8x256xf32>, i32 -> vector<8x256xf32>
    %115 = arith.mulf %114, %5 : vector<8x256xf32>
    %c48_105 = arith.constant 48 : index
    %c256_106 = arith.constant 256 : index
    %116 = vector.load %arg6[%c48_105, %c256_106] : memref<73x512xf32, #tpu.memory_space<vmem>>, vector<8x256xf32>
    tpu.vector_store %arg6[%c48_105, %c256_106], %115 {strides = array<i32>} : memref<73x512xf32, #tpu.memory_space<vmem>>, vector<8x256xf32>,
    %c240_i32_107 = arith.constant 240 : i32
    %117 = tpu.dynamic_rotate %72 by %c240_i32_107 dim 1 : vector<8x256xf32>, i32 -> vector<8x256xf32>
    %118 = arith.mulf %117, %6 : vector<8x256xf32>
    %c56_108 = arith.constant 56 : index
    %c256_109 = arith.constant 256 : index
    %119 = vector.load %arg6[%c56_108, %c256_109] : memref<73x512xf32, #tpu.memory_space<vmem>>, vector<8x256xf32>
    tpu.vector_store %arg6[%c56_108, %c256_109], %118 {strides = array<i32>} : memref<73x512xf32, #tpu.memory_space<vmem>>, vector<8x256xf32>,
    %c239_i32_110 = arith.constant 239 : i32
    %120 = tpu.dynamic_rotate %72 by %c239_i32_110 dim 1 : vector<8x256xf32>, i32 -> vector<8x256xf32>
    %121 = arith.mulf %120, %7 : vector<8x256xf32>
    %c64_111 = arith.constant 64 : index
    %c256_112 = arith.constant 256 : index
    %122 = vector.load %arg6[%c64_111, %c256_112] : memref<73x512xf32, #tpu.memory_space<vmem>>, vector<8x256xf32>
    tpu.vector_store %arg6[%c64_111, %c256_112], %121 {strides = array<i32>} : memref<73x512xf32, #tpu.memory_space<vmem>>, vector<8x256xf32>,
    %c0_113 = arith.constant 0 : index
    %c0_114 = arith.constant 0 : index
    %123 = vector.load %arg3[%c0_113, %c0_114] : memref<16x73xbf16, #tpu.memory_space<vmem>>, vector<16x73xbf16>
    %c0_115 = arith.constant 0 : index
    %c0_116 = arith.constant 0 : index
    %124 = vector.load %arg6[%c0_115, %c0_116] : memref<73x512xf32, #tpu.memory_space<vmem>>, vector<73x512xf32>
    %125 = arith.truncf %124 : vector<73x512xf32> to vector<73x512xbf16>
    %cst_117 = arith.constant dense<0.000000e+00> : vector<16x512xf32>
    %126 = tpu.matmul %123, %125, %cst_117 {dimension_numbers = #tpu.dot_dimension_numbers<[1], [0], [0], [1], [0, 0, 1, 1], [], []>} : vector<16x73xbf16>, vector<73x512xbf16>, vector<16x512xf32> -> vector<16x512xf32>
    %127 = vector.extract_strided_slice %126 {offsets = [0, 0], sizes = [8, 512], strides = [1, 1]} : vector<16x512xf32> to vector<8x512xf32>
    %128 = vector.extract_strided_slice %126 {offsets = [8, 0], sizes = [8, 512], strides = [1, 1]} : vector<16x512xf32> to vector<8x512xf32>
    %129 = arith.maximumf %127, %128 : vector<8x512xf32>
    %130 = vector.extract_strided_slice %129 {offsets = [0, 0], sizes = [8, 256], strides = [1, 1]} : vector<8x512xf32> to vector<8x256xf32>
    %131 = arith.addf %130, %11 : vector<8x256xf32>
    %c0_118 = arith.constant 0 : index
    %c0_119 = arith.constant 0 : index
    %c0_120 = arith.constant 0 : index
    %132 = vector.load %arg5[%c0_118, %c0_119, %c0_120] : memref<2x8x256xf32, #tpu.memory_space<vmem>>, vector<1x8x256xf32>
    %133 = vector.shape_cast %132 : vector<1x8x256xf32> to vector<8x256xf32>
    %134 = vector.shape_cast %131 : vector<8x256xf32> to vector<1x8x256xf32>
    tpu.vector_store %arg5[%c0_118, %c0_119, %c0_120], %134 {strides = array<i32>} : memref<2x8x256xf32, #tpu.memory_space<vmem>>, vector<1x8x256xf32>,
    %135 = vector.extract_strided_slice %129 {offsets = [0, 256], sizes = [8, 256], strides = [1, 1]} : vector<8x512xf32> to vector<8x256xf32>
    %136 = arith.addf %135, %13 : vector<8x256xf32>
    %c1_121 = arith.constant 1 : index
    %c0_122 = arith.constant 0 : index
    %c0_123 = arith.constant 0 : index
    %137 = vector.load %arg5[%c1_121, %c0_122, %c0_123] : memref<2x8x256xf32, #tpu.memory_space<vmem>>, vector<1x8x256xf32>
    %138 = vector.shape_cast %137 : vector<1x8x256xf32> to vector<8x256xf32>
    %139 = vector.shape_cast %136 : vector<8x256xf32> to vector<1x8x256xf32>
    tpu.vector_store %arg5[%c1_121, %c0_122, %c0_123], %139 {strides = array<i32>} : memref<2x8x256xf32, #tpu.memory_space<vmem>>, vector<1x8x256xf32>,
    return
  }
  func.func @transform_0(%arg0: i32) -> (i32, i32, i32) {
    %c0_i32 = arith.constant 0 : i32
    %c0_i32_0 = arith.constant 0 : i32
    %c0_i32_1 = arith.constant 0 : i32
    return %arg0, %c0_i32, %c0_i32_0 : i32, i32, i32
  }
  func.func @transform_1(%arg0: i32) -> (i32, i32) {
    %c0_i32 = arith.constant 0 : i32
    %c0_i32_0 = arith.constant 0 : i32
    %c0_i32_1 = arith.constant 0 : i32
    return %c0_i32, %c0_i32_0 : i32, i32
  }
  func.func @transform_2(%arg0: i32) -> (i32, i32) {
    %c0_i32 = arith.constant 0 : i32
    %c0_i32_0 = arith.constant 0 : i32
    %c0_i32_1 = arith.constant 0 : i32
    return %c0_i32, %c0_i32_0 : i32, i32
  }
  func.func @transform_3(%arg0: i32) -> (i32, i32) {
    %c0_i32 = arith.constant 0 : i32
    %c0_i32_0 = arith.constant 0 : i32
    %c0_i32_1 = arith.constant 0 : i32
    return %c0_i32, %c0_i32_0 : i32, i32
  }
  func.func @transform_4(%arg0: i32) -> (i32, i32, i32) {
    %c0_i32 = arith.constant 0 : i32
    %c0_i32_0 = arith.constant 0 : i32
    %c0_i32_1 = arith.constant 0 : i32
    return %arg0, %c0_i32, %c0_i32_0 : i32, i32, i32
  }
}

</mosaic_0001>

<llo_original>
// kernel: resblock_forward.1
$region0: #{resblock_forward.1}
  #allocation0 [shape = 'u32[]', space=smem, size = 0x4, offset = 0x4, fixed_abs, tag = 'smem constant byte address 0x4 - core index']
  #allocation1 [shape = 'u32[144,128]{1,0:T(1,128)}', space=vmem, size = 0x12000, scoped, tag = 'internal scratch']
  #allocation2 [shape = 'f32[73,512]{1,0:T(8,128)}', space=vmem, size = 0x28000, scoped, tag = 'scratch operand']
  %s0 = inlined_call_operand.vmem [shape: f32[4,8,256], index: 0, kind: input, shape index: {}]
  %s1 = inlined_call_operand.vmem [shape: bf16[16,73], index: 1, kind: input, shape index: {}]
  %s2 = inlined_call_operand.vmem [shape: bf16[16,73], index: 2, kind: input, shape index: {}]
  %s3 = inlined_call_operand.vmem [shape: f32[72,256], index: 3, kind: input, shape index: {}]
  %s4 = inlined_call_operand.vmem [shape: f32[4,8,256], index: 4, kind: output, shape index: {}]
  %s5 = sld [smem:[#allocation0]]
  $region49: #{resblock_forward.1} parent=0
    _
  %s7 = ssub.s32 1, %s5
  %s8 = scalar_select 0, %s7, %s5
  loop: start=0, step=1, limit=4
  $region2: #{resblock_forward.1} parent=0 // loop_pre_header
    _
  $region3: #{resblock_forward.1} parent=0 // loop_header
    %s10 = sphi 0, %s14
    %p11 = scmp.ge.s32.totalorder %s10, 4
    %s20 = sphi 0, %s22
    %s23 = sphi 0, %s20
    %s24 = sphi 0, %s23
    %s40 = sphi 0, %s24
    %s44 = sphi 0, %s44
    %s46 = sphi 0, %s44
    %s47 = sphi 0, %s46
    %s61 = sphi 0, %s47
    %s65 = sphi 0, %s65
    %s67 = sphi 0, %s65
    %s68 = sphi 0, %s67
    %s82 = sphi 0, %s68
    %s86 = sphi 0, %s86
    %s88 = sphi 0, %s86
    %s89 = sphi 0, %s88
    %s103 = sphi 0, %s89
    %s109 = sphi 0, %s111
    %s112 = sphi 0, %s109
    %s113 = sphi 0, %s112
    %s129 = sphi 0, %s113
  $region4: #{resblock_forward.1} parent=0 // loop_header_branch
    %13 = sbr.rel (%p11) target = $region8
  $region5: #{resblock_forward.1} parent=0 // loop_body
    %s15 = ssub.s32 %s10, 1
    %s16 = ssub.s32 %s10, 2
    %s17 = sadd.s32 %s10, 1
    %s18 = ssub.s32 %s10, %s17
    %p19 = scmp.eq.s32.totalorder %s18, 0
    %s21 = sadd.s32 %s20, 1
    %s22 = scalar_select %p19, %s20, %s21
    %p25 = pneg %p19
    %p26 = scmp.eq.s32.totalorder %s10, 1
    %p27 = por %p25, %p26
    %p28 = scmp.ne.s32.totalorder %s20, %s23
    %p29 = scmp.eq.s32.totalorder %s10, 0
    %p30 = por %p28, %p29
    %p31 = scmp.ne.s32.totalorder %s20, %s23
    %p32 = scmp.eq.s32.totalorder %s15, 1
    %p33 = por %p31, %p32
    %p34 = scmp.ne.s32.totalorder %s23, %s24
    %p35 = scmp.eq.s32.totalorder %s15, 0
    %p36 = por %p34, %p35
    %p37 = scmp.ne.s32.totalorder %s23, %s24
    %p38 = scmp.eq.s32.totalorder %s16, 1
    %p39 = por %p37, %p38
    %p41 = scmp.ne.s32.totalorder %s24, %s40
    %p42 = scmp.eq.s32.totalorder %s16, 0
    %p43 = por %p41, %p42
    %s45 = sadd.s32 %s44, 1
    %p48 = scmp.eq.s32.totalorder %s10, 1
    %p49 = scmp.ne.s32.totalorder %s44, %s46
    %p50 = scmp.eq.s32.totalorder %s10, 0
    %p51 = por %p49, %p50
    %p52 = scmp.ne.s32.totalorder %s44, %s46
    %p53 = scmp.eq.s32.totalorder %s15, 1
    %p54 = por %p52, %p53
    %p55 = scmp.ne.s32.totalorder %s46, %s47
    %p56 = scmp.eq.s32.totalorder %s15, 0
    %p57 = por %p55, %p56
    %p58 = scmp.ne.s32.totalorder %s46, %s47
    %p59 = scmp.eq.s32.totalorder %s16, 1
    %p60 = por %p58, %p59
    %p62 = scmp.ne.s32.totalorder %s47, %s61
    %p63 = scmp.eq.s32.totalorder %s16, 0
    %p64 = por %p62, %p63
    %s66 = sadd.s32 %s65, 1
    %p69 = scmp.eq.s32.totalorder %s10, 1
    %p70 = scmp.ne.s32.totalorder %s65, %s67
    %p71 = scmp.eq.s32.totalorder %s10, 0
    %p72 = por %p70, %p71
    %p73 = scmp.ne.s32.totalorder %s65, %s67
    %p74 = scmp.eq.s32.totalorder %s15, 1
    %p75 = por %p73, %p74
    %p76 = scmp.ne.s32.totalorder %s67, %s68
    %p77 = scmp.eq.s32.totalorder %s15, 0
    %p78 = por %p76, %p77
    %p79 = scmp.ne.s32.totalorder %s67, %s68
    %p80 = scmp.eq.s32.totalorder %s16, 1
    %p81 = por %p79, %p80
    %p83 = scmp.ne.s32.totalorder %s68, %s82
    %p84 = scmp.eq.s32.totalorder %s16, 0
    %p85 = por %p83, %p84
    %s87 = sadd.s32 %s86, 1
    %p90 = scmp.eq.s32.totalorder %s10, 1
    %p91 = scmp.ne.s32.totalorder %s86, %s88
    %p92 = scmp.eq.s32.totalorder %s10, 0
    %p93 = por %p91, %p92
    %p94 = scmp.ne.s32.totalorder %s86, %s88
    %p95 = scmp.eq.s32.totalorder %s15, 1
    %p96 = por %p94, %p95
    %p97 = scmp.ne.s32.totalorder %s88, %s89
    %p98 = scmp.eq.s32.totalorder %s15, 0
    %p99 = por %p97, %p98
    %p100 = scmp.ne.s32.totalorder %s88, %s89
    %p101 = scmp.eq.s32.totalorder %s16, 1
    %p102 = por %p100, %p101
    %p104 = scmp.ne.s32.totalorder %s89, %s103
    %p105 = scmp.eq.s32.totalorder %s16, 0
    %p106 = por %p104, %p105
    %s107 = ssub.s32 %s10, %s17
    %p108 = scmp.eq.s32.totalorder %s107, 0
    %s110 = sadd.s32 %s109, 1
    %s111 = scalar_select %p108, %s109, %s110
    %p114 = pneg %p108
    %p115 = scmp.eq.s32.totalorder %s10, 1
    %p116 = por %p114, %p115
    %p117 = scmp.ne.s32.totalorder %s109, %s112
    %p118 = scmp.eq.s32.totalorder %s10, 0
    %p119 = por %p117, %p118
    %p120 = scmp.ne.s32.totalorder %s109, %s112
    %p121 = scmp.eq.s32.totalorder %s15, 1
    %p122 = por %p120, %p121
    %p123 = scmp.ne.s32.totalorder %s112, %s113
    %p124 = scmp.eq.s32.totalorder %s15, 0
    %p125 = por %p123, %p124
    %p126 = scmp.ne.s32.totalorder %s112, %s113
    %p127 = scmp.eq.s32.totalorder %s16, 1
    %p128 = por %p126, %p127
    %p130 = scmp.ne.s32.totalorder %s113, %s129
    %p131 = scmp.eq.s32.totalorder %s16, 0
    %p132 = por %p130, %p131
    %p133 = scmp.le.s32.totalorder 1, %s10
    %p134 = scmp.lt.s32.totalorder %s10, 3
    %p135 = pnand %p133, %p134
    %p136 = pneg %p135
    // Predicated region
    $region9: #{resblock_forward.1} parent=5 // pred_check
      _
    $region10: #{resblock_forward.1} parent=5 // pred_check_branch
      %138 = sbr.rel (%p135) target = $region12
    $region11: #{resblock_forward.1} parent=5 // pred_region
      %s139 = ssub.s32 %s10, 1
      // Predicated region
      $region13: #{resblock_forward.1} parent=11 // pred_check
        %p140 = pneg %p57
      $region14: #{resblock_forward.1} parent=11 // pred_check_branch
        %142 = sbr.rel (%p140) target = $region16
      $region15: #{resblock_forward.1} parent=11 // pred_region
        _
      $region16: #{resblock_forward.1} parent=11 // pred_fallthru
        _
      // Predicated region
      $region17: #{resblock_forward.1} parent=11 // pred_check
        %p143 = pneg %p78
      $region18: #{resblock_forward.1} parent=11 // pred_check_branch
        %145 = sbr.rel (%p143) target = $region20
      $region19: #{resblock_forward.1} parent=11 // pred_region
        _
      $region20: #{resblock_forward.1} parent=11 // pred_fallthru
        _
      // Predicated region
      $region21: #{resblock_forward.1} parent=11 // pred_check
        %p146 = pneg %p99
      $region22: #{resblock_forward.1} parent=11 // pred_check_branch
        %148 = sbr.rel (%p146) target = $region24
      $region23: #{resblock_forward.1} parent=11 // pred_region
        _
      $region24: #{resblock_forward.1} parent=11 // pred_fallthru
        _
    $region12: #{resblock_forward.1} parent=5 // pred_fallthru
      _
    %p149 = scmp.lt.s32.totalorder %s10, 2
    // Predicated region
    $region25: #{resblock_forward.1} parent=5 // pred_check
      %p150 = pneg %p149
    $region26: #{resblock_forward.1} parent=5 // pred_check_branch
      %152 = sbr.rel (%p150) target = $region28
    $region27: #{resblock_forward.1} parent=5 // pred_region
      // Predicated region
      $region29: #{resblock_forward.1} parent=27 // pred_check
        %p153 = pneg %p30
      $region30: #{resblock_forward.1} parent=27 // pred_check_branch
        %155 = sbr.rel (%p153) target = $region32
      $region31: #{resblock_forward.1} parent=27 // pred_region
        %s156 = smul.u32 2, %s10
        %p157 = scmp.lt.s32.totalorder %s156, 3
        %s158 = scalar_select %p157, %s156, 3
        %s159 = smul.addr %s158, 2
        %s160 = smul.addr %s159, 8
        %s161 = scalar_lea.vmem %s0, %s160
        %s162 = smul.u32 2, %s10
      $region32: #{resblock_forward.1} parent=27 // pred_fallthru
        _
    $region28: #{resblock_forward.1} parent=5 // pred_fallthru
      _
    %p163 = scmp.le.s32.totalorder 1, %s10
    %p164 = scmp.lt.s32.totalorder %s10, 3
    %p165 = pnand %p163, %p164
    %p166 = pneg %p165
    // Predicated region
    $region33: #{resblock_forward.1} parent=5 // pred_check
      _
    $region34: #{resblock_forward.1} parent=5 // pred_check_branch
      %168 = sbr.rel (%p165) target = $region36
    $region35: #{resblock_forward.1} parent=5 // pred_region
      %s169 = ssub.s32 %s10, 1
      %s170 = smul.u32 2, %s15
      %p171 = scmp.lt.s32.totalorder %s170, 3
      %s172 = scalar_select %p171, %s170, 3
      %s173 = smul.addr %s172, 2
      %s174 = smul.addr %s173, 8
      %s175 = scalar_lea.vmem %s0, %s174
      %p176 = pneg %p36
      %p177 = pneg %p33
      %p178 = pneg %p57
      %p179 = pneg %p54
      %p180 = pneg %p78
      %p181 = pneg %p75
      %p182 = pneg %p99
      %p183 = pneg %p96
      %p184 = pneg %p125
      %p185 = pneg %p122
      %s186 = smul.u32 2, %s15
      %p187 = scmp.lt.s32.totalorder %s186, 3
      %s188 = scalar_select %p187, %s186, 3
      %s189 = smul.addr %s188, 2
      %s190 = smul.addr %s189, 8
      %s191 = scalar_lea.vmem %s4, %s190
      %s192 = smul.u32 2, %s15
      %p193 = scmp.lt.s32.totalorder %s192, 3
      %s194 = scalar_select %p193, %s192, 3
      %s195 = smul.addr %s194, 2
      %s196 = smul.addr %s195, 8
      %s197 = scalar_lea.vmem %s0, %s196
      %s198 = smul.u32 2, %s15
      %s199 = smul.u32 2, %s15
      %p200 = scmp.lt.s32.totalorder %s199, 3
      %s201 = scalar_select %p200, %s199, 3
      %s202 = smul.addr %s201, 2
      %s203 = smul.addr %s202, 8
      %s204 = scalar_lea.vmem %s4, %s203
      %s205 = smul.u32 2, %s15
      %v207 = vld [vmem:[%s3] sm:$0xff]
      %v208 = vld [vmem:[%s3 + $0x8] sm:$0xff]
      %v209 = vld [vmem:[%s3 + $0x10] sm:$0xff]
      %v210 = vld [vmem:[%s3 + $0x18] sm:$0xff]
      %v211 = vld [vmem:[%s3 + $0x20] sm:$0xff]
      %v212 = vld [vmem:[%s3 + $0x28] sm:$0xff]
      %v213 = vld [vmem:[%s3 + $0x30] sm:$0xff]
      %v214 = vld [vmem:[%s3 + $0x38] sm:$0xff]
      %v215 = vld [vmem:[%s3 + $0x50] sm:$0xff]
      %v216 = vld [vmem:[%s3 + $0x58] sm:$0xff]
      %v217 = vld [vmem:[%s3 + $0x60] sm:$0xff]
      %v218 = vld [vmem:[%s3 + $0x68] sm:$0xff]
      %v219 = vld [vmem:[%s3 + $0x70] sm:$0xff]
      %v220 = vld [vmem:[%s3 + $0x78] sm:$0xff]
      %v221 = vld [vmem:[%s3 + $0x80] sm:$0xff]
      %v222 = vld [vmem:[%s3 + $0x88] sm:$0xff]
      %v223 = vlaneseq
      %vm224 = vcmp.ge.s32.totalorder %v223, 0
      %vm225 = vcmp.lt.s32.totalorder %v223, 512
      %vm226 = vmand %vm224, %vm225
      %s227 = scalar_lea.vmem [#allocation2], 288
      %228 = vst.msk [vmem:[%s227] ss:$8 sm:$0xf] %vm226, 1.0
      %229 = vst.msk [vmem:[%s227] ss:$8 sm:$0x0] %vm226, 1.0
      %v230 = vld [vmem:[%s197] sm:$0xff]
      %v231 = vld [vmem:[%s197 + $0x8] sm:$0xff]
      %s232 = scalar_lea.vmem %s197, 16
      %v233 = vld [vmem:[%s232] sm:$0xff]
      %v234 = vld [vmem:[%s232 + $0x8] sm:$0xff]
      %235 = vrot.lane.b32.xlu0 %v230, 17
      %v236 = vpop.permute.xlu0 %235
      %237 = vrot.lane.b32.xlu0 %v231, 17
      %v238 = vpop.permute.xlu0 %237
      %v239 = vlaneseq
      %v240 = vand.u32 %v239, 127
      %vm241 = vcmp.lt.s32.totalorder %v240, 17
      %v242 = vsel %vm241, %v236, %v238
      %v243 = vsel %vm241, %v238, %v236
      %v244 = vmul.f32 %v243, %v207
      %v245 = vmul.f32 %v242, %v208
      %246 = vst [vmem:[#allocation2] sm:$0xff] %v244
      %247 = vst [vmem:[#allocation2 + $0x8] sm:$0xff] %v245
      %248 = vrot.lane.b32.xlu0 %v230, 16
      %v249 = vpop.permute.xlu0 %248
      %250 = vrot.lane.b32.xlu0 %v231, 16
      %v251 = vpop.permute.xlu0 %250
      %vm252 = vcmp.lt.s32.totalorder %v240, 16
      %v253 = vsel %vm252, %v249, %v251
      %v254 = vsel %vm252, %v251, %v249
      %v255 = vmul.f32 %v254, %v209
      %v256 = vmul.f32 %v253, %v210
      %257 = vst [vmem:[#allocation2 + $0x20] sm:$0xff] %v255
      %258 = vst [vmem:[#allocation2 + $0x28] sm:$0xff] %v256
      %259 = vrot.lane.b32.xlu0 %v230, 15
      %v260 = vpop.permute.xlu0 %259
      %261 = vrot.lane.b32.xlu0 %v231, 15
      %v262 = vpop.permute.xlu0 %261
      %vm263 = vcmp.lt.s32.totalorder %v240, 15
      %v264 = vsel %vm263, %v260, %v262
      %v265 = vsel %vm263, %v262, %v260
      %v266 = vmul.f32 %v265, %v211
      %v267 = vmul.f32 %v264, %v212
      %268 = vst [vmem:[#allocation2 + $0x40] sm:$0xff] %v266
      %269 = vst [vmem:[#allocation2 + $0x48] sm:$0xff] %v267
      %270 = vrot.lane.b32.xlu0 %v230, 1
      %v271 = vpop.permute.xlu0 %270
      %272 = vrot.lane.b32.xlu0 %v231, 1
      %v273 = vpop.permute.xlu0 %272
      %vm274 = vcmp.lt.s32.totalorder %v240, 1
      %v275 = vsel %vm274, %v271, %v273
      %v276 = vsel %vm274, %v273, %v271
      %v277 = vmul.f32 %v276, %v213
      %v278 = vmul.f32 %v275, %v214
      %279 = vst [vmem:[#allocation2 + $0x60] sm:$0xff] %v277
      %280 = vst [vmem:[#allocation2 + $0x68] sm:$0xff] %v278
      %281 = vst [vmem:[#allocation2 + $0x80] sm:$0xff] %v230
      %282 = vst [vmem:[#allocation2 + $0x88] sm:$0xff] %v231
      %283 = vrot.lane.b32.xlu0 %v230, 127
      %v284 = vpop.permute.xlu0 %283
      %285 = vrot.lane.b32.xlu0 %v231, 127
      %v286 = vpop.permute.xlu0 %285
      %vm287 = vcmp.lt.s32.totalorder %v240, 127
      %v288 = vsel %vm287, %v284, %v286
      %v289 = vsel %vm287, %v286, %v284
      %v290 = vmul.f32 %v288, %v215
      %v291 = vmul.f32 %v289, %v216
      %292 = vst [vmem:[#allocation2 + $0xa0] sm:$0xff] %v290
      %293 = vst [vmem:[#allocation2 + $0xa8] sm:$0xff] %v291
      %294 = vrot.lane.b32.xlu0 %v230, 113
      %v295 = vpop.permute.xlu0 %294
      %296 = vrot.lane.b32.xlu0 %v231, 113
      %v297 = vpop.permute.xlu0 %296
      %vm298 = vcmp.lt.s32.totalorder %v240, 113
      %v299 = vsel %vm298, %v295, %v297
      %v300 = vsel %vm298, %v297, %v295
      %v301 = vmul.f32 %v299, %v217
      %v302 = vmul.f32 %v300, %v218
      %303 = vst [vmem:[#allocation2 + $0xc0] sm:$0xff] %v301
      %304 = vst [vmem:[#allocation2 + $0xc8] sm:$0xff] %v302
      %305 = vrot.lane.b32.xlu0 %v230, 112
      %v306 = vpop.permute.xlu0 %305
      %307 = vrot.lane.b32.xlu0 %v231, 112
      %v308 = vpop.permute.xlu0 %307
      %vm309 = vcmp.lt.s32.totalorder %v240, 112
      %v310 = vsel %vm309, %v306, %v308
      %v311 = vsel %vm309, %v308, %v306
      %v312 = vmul.f32 %v310, %v219
      %v313 = vmul.f32 %v311, %v220
      %314 = vst [vmem:[#allocation2 + $0xe0] sm:$0xff] %v312
      %315 = vst [vmem:[#allocation2 + $0xe8] sm:$0xff] %v313
      %316 = vrot.lane.b32.xlu0 %v230, 111
      %v317 = vpop.permute.xlu0 %316
      %318 = vrot.lane.b32.xlu0 %v231, 111
      %v319 = vpop.permute.xlu0 %318
      %vm320 = vcmp.lt.s32.totalorder %v240, 111
      %v321 = vsel %vm320, %v317, %v319
      %v322 = vsel %vm320, %v319, %v317
      %v323 = vmul.f32 %v321, %v221
      %v324 = vmul.f32 %v322, %v222
      %325 = vst [vmem:[#allocation2 + $0x100] sm:$0xff] %v323
      %326 = vst [vmem:[#allocation2 + $0x108] sm:$0xff] %v324
      %327 = vrot.lane.b32.xlu0 %v233, 17
      %v328 = vpop.permute.xlu0 %327
      %329 = vrot.lane.b32.xlu0 %v234, 17
      %v330 = vpop.permute.xlu0 %329
      %v331 = vsel %vm241, %v328, %v330
      %v332 = vsel %vm241, %v330, %v328
      %v333 = vmul.f32 %v332, %v207
      %v334 = vmul.f32 %v331, %v208
      %335 = vst [vmem:[#allocation2 + $0x10] sm:$0xff] %v333
      %336 = vst [vmem:[#allocation2 + $0x18] sm:$0xff] %v334
      %337 = vrot.lane.b32.xlu0 %v233, 16
      %v338 = vpop.permute.xlu0 %337
      %339 = vrot.lane.b32.xlu0 %v234, 16
      %v340 = vpop.permute.xlu0 %339
      %v341 = vsel %vm252, %v338, %v340
      %v342 = vsel %vm252, %v340, %v338
      %v343 = vmul.f32 %v342, %v209
      %v344 = vmul.f32 %v341, %v210
      %345 = vst [vmem:[#allocation2 + $0x30] sm:$0xff] %v343
      %346 = vst [vmem:[#allocation2 + $0x38] sm:$0xff] %v344
      %347 = vrot.lane.b32.xlu0 %v233, 15
      %v348 = vpop.permute.xlu0 %347
      %349 = vrot.lane.b32.xlu0 %v234, 15
      %v350 = vpop.permute.xlu0 %349
      %v351 = vsel %vm263, %v348, %v350
      %v352 = vsel %vm263, %v350, %v348
      %v353 = vmul.f32 %v352, %v211
      %v354 = vmul.f32 %v351, %v212
      %355 = vst [vmem:[#allocation2 + $0x50] sm:$0xff] %v353
      %356 = vst [vmem:[#allocation2 + $0x58] sm:$0xff] %v354
      %357 = vrot.lane.b32.xlu0 %v233, 1
      %v358 = vpop.permute.xlu0 %357
      %359 = vrot.lane.b32.xlu0 %v234, 1
      %v360 = vpop.permute.xlu0 %359
      %v361 = vsel %vm274, %v358, %v360
      %v362 = vsel %vm274, %v360, %v358
      %v363 = vmul.f32 %v362, %v213
      %v364 = vmul.f32 %v361, %v214
      %365 = vst [vmem:[#allocation2 + $0x70] sm:$0xff] %v363
      %366 = vst [vmem:[#allocation2 + $0x78] sm:$0xff] %v364
      %367 = vst [vmem:[#allocation2 + $0x90] sm:$0xff] %v233
      %368 = vst [vmem:[#allocation2 + $0x98] sm:$0xff] %v234
      %369 = vrot.lane.b32.xlu0 %v233, 127
      %v370 = vpop.permute.xlu0 %369
      %371 = vrot.lane.b32.xlu0 %v234, 127
      %v372 = vpop.permute.xlu0 %371
      %v373 = vsel %vm287, %v370, %v372
      %v374 = vsel %vm287, %v372, %v370
      %v375 = vmul.f32 %v373, %v215
      %v376 = vmul.f32 %v374, %v216
      %377 = vst [vmem:[#allocation2 + $0xb0] sm:$0xff] %v375
      %378 = vst [vmem:[#allocation2 + $0xb8] sm:$0xff] %v376
      %379 = vrot.lane.b32.xlu0 %v233, 113
      %v380 = vpop.permute.xlu0 %379
      %381 = vrot.lane.b32.xlu0 %v234, 113
      %v382 = vpop.permute.xlu0 %381
      %v383 = vsel %vm298, %v380, %v382
      %v384 = vsel %vm298, %v382, %v380
      %v385 = vmul.f32 %v383, %v217
      %v386 = vmul.f32 %v384, %v218
      %387 = vst [vmem:[#allocation2 + $0xd0] sm:$0xff] %v385
      %388 = vst [vmem:[#allocation2 + $0xd8] sm:$0xff] %v386
      %389 = vrot.lane.b32.xlu0 %v233, 112
      %v390 = vpop.permute.xlu0 %389
      %391 = vrot.lane.b32.xlu0 %v234, 112
      %v392 = vpop.permute.xlu0 %391
      %v393 = vsel %vm309, %v390, %v392
      %v394 = vsel %vm309, %v392, %v390
      %v395 = vmul.f32 %v393, %v219
      %v396 = vmul.f32 %v394, %v220
      %397 = vst [vmem:[#allocation2 + $0xf0] sm:$0xff] %v395
      %398 = vst [vmem:[#allocation2 + $0xf8] sm:$0xff] %v396
      %399 = vrot.lane.b32.xlu0 %v233, 111
      %v400 = vpop.permute.xlu0 %399
      %401 = vrot.lane.b32.xlu0 %v234, 111
      %v402 = vpop.permute.xlu0 %401
      %v403 = vsel %vm320, %v400, %v402
      %v404 = vsel %vm320, %v402, %v400
      %v405 = vmul.f32 %v403, %v221
      %v406 = vmul.f32 %v404, %v222
      %407 = vst [vmem:[#allocation2 + $0x110] sm:$0xff] %v405
      %408 = vst [vmem:[#allocation2 + $0x118] sm:$0xff] %v406
      %v409 = vld [vmem:[%s1] sm:$0xf]
      %v410 = vld [vmem:[%s1 + $0x4] sm:$0xf]
      %v411 = vld [vmem:[#allocation2] sm:$0xff]
      %v412 = vld [vmem:[#allocation2 + $0x8] sm:$0xff]
      %v413 = vld [vmem:[#allocation2 + $0x10] sm:$0xff]
      %v414 = vld [vmem:[#allocation2 + $0x18] sm:$0xff]
      %v415 = vld [vmem:[#allocation2 + $0x20] sm:$0xff]
      %v416 = vld [vmem:[#allocation2 + $0x28] sm:$0xff]
      %v417 = vld [vmem:[#allocation2 + $0x30] sm:$0xff]
      %v418 = vld [vmem:[#allocation2 + $0x38] sm:$0xff]
      %v419 = vld [vmem:[#allocation2 + $0x40] sm:$0xff]
      %v420 = vld [vmem:[#allocation2 + $0x48] sm:$0xff]
      %v421 = vld [vmem:[#allocation2 + $0x50] sm:$0xff]
      %v422 = vld [vmem:[#allocation2 + $0x58] sm:$0xff]
      %v423 = vld [vmem:[#allocation2 + $0x60] sm:$0xff]
      %v424 = vld [vmem:[#allocation2 + $0x68] sm:$0xff]
      %v425 = vld [vmem:[#allocation2 + $0x70] sm:$0xff]
      %v426 = vld [vmem:[#allocation2 + $0x78] sm:$0xff]
      %v427 = vld [vmem:[#allocation2 + $0x80] sm:$0xff]
      %v428 = vld [vmem:[#allocation2 + $0x88] sm:$0xff]
      %v429 = vld [vmem:[#allocation2 + $0x90] sm:$0xff]
      %v430 = vld [vmem:[#allocation2 + $0x98] sm:$0xff]
      %v431 = vld [vmem:[#allocation2 + $0xa0] sm:$0xff]
      %v432 = vld [vmem:[#allocation2 + $0xa8] sm:$0xff]
      %v433 = vld [vmem:[#allocation2 + $0xb0] sm:$0xff]
      %v434 = vld [vmem:[#allocation2 + $0xb8] sm:$0xff]
      %v435 = vld [vmem:[#allocation2 + $0xc0] sm:$0xff]
      %v436 = vld [vmem:[#allocation2 + $0xc8] sm:$0xff]
      %v437 = vld [vmem:[#allocation2 + $0xd0] sm:$0xff]
      %v438 = vld [vmem:[#allocation2 + $0xd8] sm:$0xff]
      %v439 = vld [vmem:[#allocation2 + $0xe0] sm:$0xff]
      %v440 = vld [vmem:[#allocation2 + $0xe8] sm:$0xff]
      %v441 = vld [vmem:[#allocation2 + $0xf0] sm:$0xff]
      %v442 = vld [vmem:[#allocation2 + $0xf8] sm:$0xff]
      %v443 = vld [vmem:[#allocation2 + $0x100] sm:$0xff]
      %v444 = vld [vmem:[#allocation2 + $0x108] sm:$0xff]
      %v445 = vld [vmem:[#allocation2 + $0x110] sm:$0xff]
      %v446 = vld [vmem:[#allocation2 + $0x118] sm:$0xff]
      %v447 = vld [vmem:[#allocation2 + $0x120] sm:$0x1]
      %v448 = vld [vmem:[#allocation2 + $0x128] sm:$0x1]
      %v449 = vld [vmem:[#allocation2 + $0x130] sm:$0x1]
      %v450 = vld [vmem:[#allocation2 + $0x138] sm:$0x1]
      %v451 = vpack.c.bf16 %v415, %v411
      %v452 = vpack.c.bf16 %v416, %v412
      %v453 = vpack.c.bf16 %v417, %v413
      %v454 = vpack.c.bf16 %v418, %v414
      %v455 = vpack.c.bf16 %v423, %v419
      %v456 = vpack.c.bf16 %v424, %v420
      %v457 = vpack.c.bf16 %v425, %v421
      %v458 = vpack.c.bf16 %v426, %v422
      %v459 = vpack.c.bf16 %v431, %v427
      %v460 = vpack.c.bf16 %v432, %v428
      %v461 = vpack.c.bf16 %v433, %v429
      %v462 = vpack.c.bf16 %v434, %v430
      %v463 = vpack.c.bf16 %v439, %v435
      %v464 = vpack.c.bf16 %v440, %v436
      %v465 = vpack.c.bf16 %v441, %v437
      %v466 = vpack.c.bf16 %v442, %v438
      %v467 = vpack.c.bf16 %v447, %v443
      %v468 = vpack.c.bf16 %v448, %v444
      %v469 = vpack.c.bf16 %v449, %v445
      %v470 = vpack.c.bf16 %v450, %v446
      %v473 = vunpack.c.l.b16 %v409
      %v474 = vunpack.c.l.b16 %v410
      %v475 = vpack.c.b16 %v474, %v473
      %vm476 = vcmask 596992
      %v478 = vsel %vm476, %v475, 0
      %vm480 = vcmask 1043456
      %vm481 = vcmask 1044480
      %v482 = vsel %vm480, 4294967295, 65535
      %v483 = vsel %vm481, %v482, 0
      %v485 = vand.u32 %v467, %v483
      %v488 = vand.u32 %v468, %v483
      %v491 = vand.u32 %v469, %v483
      %v494 = vand.u32 %v470, %v483
      %496 = vmatprep.subr.bf16.mxu0 %v452
      %497 = vmatpush1.bf16.msra.mxu0 %v451
      %498 = vmatprep.subr.bf16.mxu0 %v456
      %499 = vmatpush1.bf16.msra.mxu0 %v455
      %500 = vmatprep.subr.bf16.mxu0 %v460
      %501 = vmatpush1.bf16.msra.mxu0 %v459
      %502 = vmatprep.subr.bf16.mxu0 %v464
      %503 = vmatpush1.bf16.msra.mxu0 %v463
      %504 = vmatprep.subr.bf16.mxu0 %v488
      %505 = vmatpush1.bf16.msra.mxu0 %v485
      %506 = vmatprep.subr.bf16.mxu0 0
      %507 = vmatpush1.bf16.msra.mxu0 0
      %508 = vmatprep.subr.bf16.mxu0 0
      %509 = vmatpush1.bf16.msra.mxu0 0
      %510 = vmatprep.subr.bf16.mxu0 0
      %511 = vmatpush1.bf16.msra.mxu0 0
      %512 = vmatprep.subr.bf16.mxu0 0
      %513 = vmatpush1.bf16.msra.mxu0 0
      %514 = vmatprep.subr.bf16.mxu0 0
      %515 = vmatpush1.bf16.msra.mxu0 0
      %516 = vmatprep.subr.bf16.mxu0 0
      %517 = vmatpush1.bf16.msra.mxu0 0
      %518 = vmatprep.subr.bf16.mxu0 0
      %519 = vmatpush1.bf16.msra.mxu0 0
      %520 = vmatprep.subr.bf16.mxu0 0
      %521 = vmatpush1.bf16.msra.mxu0 0
      %522 = vmatprep.subr.bf16.mxu0 0
      %523 = vmatpush1.bf16.msra.mxu0 0
      %524 = vmatprep.subr.bf16.mxu0 0
      %525 = vmatpush1.bf16.msra.mxu0 0
      %526 = vmatprep.subr.bf16.mxu0 0
      %527 = vmatpush1.bf16.msra.mxu0 0
      %528 = vmatprep.mubr.bf16.mxu0 0
      %529 = vmatmul.mubr.bf16.gmra.mrb[0].mxu0 %v478
      %v530 = vpop.f32.mrb[0].mxu0
      %v531 = vadd.f32 0.0, %v530
      %v532 = vpop.f32.mrb[0].mxu0
      %v533 = vadd.f32 0.0, %v532
      %v534 = vpop.f32.mrb[0].mxu0
      %v535 = vadd.f32 0.0, %v534
      %v536 = vpop.f32.mrb[0].mxu0
      %v537 = vadd.f32 0.0, %v536
      %538 = vdwg.mxu0
      %539 = vmatprep.subr.bf16.mxu0 %v454
      %540 = vmatpush1.bf16.msra.mxu0 %v453
      %541 = vmatprep.subr.bf16.mxu0 %v458
      %542 = vmatpush1.bf16.msra.mxu0 %v457
      %543 = vmatprep.subr.bf16.mxu0 %v462
      %544 = vmatpush1.bf16.msra.mxu0 %v461
      %545 = vmatprep.subr.bf16.mxu0 %v466
      %546 = vmatpush1.bf16.msra.mxu0 %v465
      %547 = vmatprep.subr.bf16.mxu0 %v494
      %548 = vmatpush1.bf16.msra.mxu0 %v491
      %549 = vmatprep.subr.bf16.mxu0 0
      %550 = vmatpush1.bf16.msra.mxu0 0
      %551 = vmatprep.subr.bf16.mxu0 0
      %552 = vmatpush1.bf16.msra.mxu0 0
      %553 = vmatprep.subr.bf16.mxu0 0
      %554 = vmatpush1.bf16.msra.mxu0 0
      %555 = vmatprep.subr.bf16.mxu0 0
      %556 = vmatpush1.bf16.msra.mxu0 0
      %557 = vmatprep.subr.bf16.mxu0 0
      %558 = vmatpush1.bf16.msra.mxu0 0
      %559 = vmatprep.subr.bf16.mxu0 0
      %560 = vmatpush1.bf16.msra.mxu0 0
      %561 = vmatprep.subr.bf16.mxu0 0
      %562 = vmatpush1.bf16.msra.mxu0 0
      %563 = vmatprep.subr.bf16.mxu0 0
      %564 = vmatpush1.bf16.msra.mxu0 0
      %565 = vmatprep.subr.bf16.mxu0 0
      %566 = vmatpush1.bf16.msra.mxu0 0
      %567 = vmatprep.subr.bf16.mxu0 0
      %568 = vmatpush1.bf16.msra.mxu0 0
      %569 = vmatprep.subr.bf16.mxu0 0
      %570 = vmatpush1.bf16.msra.mxu0 0
      %571 = vmatprep.mubr.bf16.mxu0 0
      %572 = vmatmul.mubr.bf16.gmra.mrb[0].mxu0 %v478
      %v573 = vpop.f32.mrb[0].mxu0
      %v574 = vadd.f32 0.0, %v573
      %v575 = vpop.f32.mrb[0].mxu0
      %v576 = vadd.f32 0.0, %v575
      %v577 = vpop.f32.mrb[0].mxu0
      %v578 = vadd.f32 0.0, %v577
      %v579 = vpop.f32.mrb[0].mxu0
      %v580 = vadd.f32 0.0, %v579
      %581 = vdwg.mxu0
      %v582 = vmax.f32 %v531, %v535
      %v583 = vmax.f32 %v533, %v537
      %v584 = vmax.f32 %v574, %v578
      %v585 = vmax.f32 %v576, %v580
      %586 = vrot.lane.b32.xlu0 %v582, 17
      %v587 = vpop.permute.xlu0 %586
      %588 = vrot.lane.b32.xlu0 %v583, 17
      %v589 = vpop.permute.xlu0 %588
      %v590 = vsel %vm241, %v587, %v589
      %v591 = vsel %vm241, %v589, %v587
      %v592 = vmul.f32 %v591, %v207
      %v593 = vmul.f32 %v590, %v208
      %594 = vst [vmem:[#allocation2] sm:$0xff] %v592
      %595 = vst [vmem:[#allocation2 + $0x8] sm:$0xff] %v593
      %596 = vrot.lane.b32.xlu0 %v582, 16
      %v597 = vpop.permute.xlu0 %596
      %598 = vrot.lane.b32.xlu0 %v583, 16
      %v599 = vpop.permute.xlu0 %598
      %v600 = vsel %vm252, %v597, %v599
      %v601 = vsel %vm252, %v599, %v597
      %v602 = vmul.f32 %v601, %v209
      %v603 = vmul.f32 %v600, %v210
      %604 = vst [vmem:[#allocation2 + $0x20] sm:$0xff] %v602
      %605 = vst [vmem:[#allocation2 + $0x28] sm:$0xff] %v603
      %606 = vrot.lane.b32.xlu0 %v582, 15
      %v607 = vpop.permute.xlu0 %606
      %608 = vrot.lane.b32.xlu0 %v583, 15
      %v609 = vpop.permute.xlu0 %608
      %v610 = vsel %vm263, %v607, %v609
      %v611 = vsel %vm263, %v609, %v607
      %v612 = vmul.f32 %v611, %v211
      %v613 = vmul.f32 %v610, %v212
      %614 = vst [vmem:[#allocation2 + $0x40] sm:$0xff] %v612
      %615 = vst [vmem:[#allocation2 + $0x48] sm:$0xff] %v613
      %616 = vrot.lane.b32.xlu0 %v582, 1
      %v617 = vpop.permute.xlu0 %616
      %618 = vrot.lane.b32.xlu0 %v583, 1
      %v619 = vpop.permute.xlu0 %618
      %v620 = vsel %vm274, %v617, %v619
      %v621 = vsel %vm274, %v619, %v617
      %v622 = vmul.f32 %v621, %v213
      %v623 = vmul.f32 %v620, %v214
      %624 = vst [vmem:[#allocation2 + $0x60] sm:$0xff] %v622
      %625 = vst [vmem:[#allocation2 + $0x68] sm:$0xff] %v623
      %626 = vst [vmem:[#allocation2 + $0x80] sm:$0xff] %v582
      %627 = vst [vmem:[#allocation2 + $0x88] sm:$0xff] %v583
      %628 = vrot.lane.b32.xlu0 %v582, 127
      %v629 = vpop.permute.xlu0 %628
      %630 = vrot.lane.b32.xlu0 %v583, 127
      %v631 = vpop.permute.xlu0 %630
      %v632 = vsel %vm287, %v629, %v631
      %v633 = vsel %vm287, %v631, %v629
      %v634 = vmul.f32 %v632, %v215
      %v635 = vmul.f32 %v633, %v216
      %636 = vst [vmem:[#allocation2 + $0xa0] sm:$0xff] %v634
      %637 = vst [vmem:[#allocation2 + $0xa8] sm:$0xff] %v635
      %638 = vrot.lane.b32.xlu0 %v582, 113
      %v639 = vpop.permute.xlu0 %638
      %640 = vrot.lane.b32.xlu0 %v583, 113
      %v641 = vpop.permute.xlu0 %640
      %v642 = vsel %vm298, %v639, %v641
      %v643 = vsel %vm298, %v641, %v639
      %v644 = vmul.f32 %v642, %v217
      %v645 = vmul.f32 %v643, %v218
      %646 = vst [vmem:[#allocation2 + $0xc0] sm:$0xff] %v644
      %647 = vst [vmem:[#allocation2 + $0xc8] sm:$0xff] %v645
      %648 = vrot.lane.b32.xlu0 %v582, 112
      %v649 = vpop.permute.xlu0 %648
      %650 = vrot.lane.b32.xlu0 %v583, 112
      %v651 = vpop.permute.xlu0 %650
      %v652 = vsel %vm309, %v649, %v651
      %v653 = vsel %vm309, %v651, %v649
      %v654 = vmul.f32 %v652, %v219
      %v655 = vmul.f32 %v653, %v220
      %656 = vst [vmem:[#allocation2 + $0xe0] sm:$0xff] %v654
      %657 = vst [vmem:[#allocation2 + $0xe8] sm:$0xff] %v655
      %658 = vrot.lane.b32.xlu0 %v582, 111
      %v659 = vpop.permute.xlu0 %658
      %660 = vrot.lane.b32.xlu0 %v583, 111
      %v661 = vpop.permute.xlu0 %660
      %v662 = vsel %vm320, %v659, %v661
      %v663 = vsel %vm320, %v661, %v659
      %v664 = vmul.f32 %v662, %v221
      %v665 = vmul.f32 %v663, %v222
      %666 = vst [vmem:[#allocation2 + $0x100] sm:$0xff] %v664
      %667 = vst [vmem:[#allocation2 + $0x108] sm:$0xff] %v665
      %668 = vrot.lane.b32.xlu0 %v584, 17
      %v669 = vpop.permute.xlu0 %668
      %670 = vrot.lane.b32.xlu0 %v585, 17
      %v671 = vpop.permute.xlu0 %670
      %v672 = vsel %vm241, %v669, %v671
      %v673 = vsel %vm241, %v671, %v669
      %v674 = vmul.f32 %v673, %v207
      %v675 = vmul.f32 %v672, %v208
      %676 = vst [vmem:[#allocation2 + $0x10] sm:$0xff] %v674
      %677 = vst [vmem:[#allocation2 + $0x18] sm:$0xff] %v675
      %678 = vrot.lane.b32.xlu0 %v584, 16
      %v679 = vpop.permute.xlu0 %678
      %680 = vrot.lane.b32.xlu0 %v585, 16
      %v681 = vpop.permute.xlu0 %680
      %v682 = vsel %vm252, %v679, %v681
      %v683 = vsel %vm252, %v681, %v679
      %v684 = vmul.f32 %v683, %v209
      %v685 = vmul.f32 %v682, %v210
      %686 = vst [vmem:[#allocation2 + $0x30] sm:$0xff] %v684
      %687 = vst [vmem:[#allocation2 + $0x38] sm:$0xff] %v685
      %688 = vrot.lane.b32.xlu0 %v584, 15
      %v689 = vpop.permute.xlu0 %688
      %690 = vrot.lane.b32.xlu0 %v585, 15
      %v691 = vpop.permute.xlu0 %690
      %v692 = vsel %vm263, %v689, %v691
      %v693 = vsel %vm263, %v691, %v689
      %v694 = vmul.f32 %v693, %v211
      %v695 = vmul.f32 %v692, %v212
      %696 = vst [vmem:[#allocation2 + $0x50] sm:$0xff] %v694
      %697 = vst [vmem:[#allocation2 + $0x58] sm:$0xff] %v695
      %698 = vrot.lane.b32.xlu0 %v584, 1
      %v699 = vpop.permute.xlu0 %698
      %700 = vrot.lane.b32.xlu0 %v585, 1
      %v701 = vpop.permute.xlu0 %700
      %v702 = vsel %vm274, %v699, %v701
      %v703 = vsel %vm274, %v701, %v699
      %v704 = vmul.f32 %v703, %v213
      %v705 = vmul.f32 %v702, %v214
      %706 = vst [vmem:[#allocation2 + $0x70] sm:$0xff] %v704
      %707 = vst [vmem:[#allocation2 + $0x78] sm:$0xff] %v705
      %708 = vst [vmem:[#allocation2 + $0x90] sm:$0xff] %v584
      %709 = vst [vmem:[#allocation2 + $0x98] sm:$0xff] %v585
      %710 = vrot.lane.b32.xlu0 %v584, 127
      %v711 = vpop.permute.xlu0 %710
      %712 = vrot.lane.b32.xlu0 %v585, 127
      %v713 = vpop.permute.xlu0 %712
      %v714 = vsel %vm287, %v711, %v713
      %v715 = vsel %vm287, %v713, %v711
      %v716 = vmul.f32 %v714, %v215
      %v717 = vmul.f32 %v715, %v216
      %718 = vst [vmem:[#allocation2 + $0xb0] sm:$0xff] %v716
      %719 = vst [vmem:[#allocation2 + $0xb8] sm:$0xff] %v717
      %720 = vrot.lane.b32.xlu0 %v584, 113
      %v721 = vpop.permute.xlu0 %720
      %722 = vrot.lane.b32.xlu0 %v585, 113
      %v723 = vpop.permute.xlu0 %722
      %v724 = vsel %vm298, %v721, %v723
      %v725 = vsel %vm298, %v723, %v721
      %v726 = vmul.f32 %v724, %v217
      %v727 = vmul.f32 %v725, %v218
      %728 = vst [vmem:[#allocation2 + $0xd0] sm:$0xff] %v726
      %729 = vst [vmem:[#allocation2 + $0xd8] sm:$0xff] %v727
      %730 = vrot.lane.b32.xlu0 %v584, 112
      %v731 = vpop.permute.xlu0 %730
      %732 = vrot.lane.b32.xlu0 %v585, 112
      %v733 = vpop.permute.xlu0 %732
      %v734 = vsel %vm309, %v731, %v733
      %v735 = vsel %vm309, %v733, %v731
      %v736 = vmul.f32 %v734, %v219
      %v737 = vmul.f32 %v735, %v220
      %738 = vst [vmem:[#allocation2 + $0xf0] sm:$0xff] %v736
      %739 = vst [vmem:[#allocation2 + $0xf8] sm:$0xff] %v737
      %740 = vrot.lane.b32.xlu0 %v584, 111
      %v741 = vpop.permute.xlu0 %740
      %742 = vrot.lane.b32.xlu0 %v585, 111
      %v743 = vpop.permute.xlu0 %742
      %v744 = vsel %vm320, %v741, %v743
      %v745 = vsel %vm320, %v743, %v741
      %v746 = vmul.f32 %v744, %v221
      %v747 = vmul.f32 %v745, %v222
      %748 = vst [vmem:[#allocation2 + $0x110] sm:$0xff] %v746
      %749 = vst [vmem:[#allocation2 + $0x118] sm:$0xff] %v747
      %v750 = vld [vmem:[%s2] sm:$0xf]
      %v751 = vld [vmem:[%s2 + $0x4] sm:$0xf]
      %v752 = vld [vmem:[#allocation2] sm:$0xff]
      %v753 = vld [vmem:[#allocation2 + $0x8] sm:$0xff]
      %v754 = vld [vmem:[#allocation2 + $0x10] sm:$0xff]
      %v755 = vld [vmem:[#allocation2 + $0x18] sm:$0xff]
      %v756 = vld [vmem:[#allocation2 + $0x20] sm:$0xff]
      %v757 = vld [vmem:[#allocation2 + $0x28] sm:$0xff]
      %v758 = vld [vmem:[#allocation2 + $0x30] sm:$0xff]
      %v759 = vld [vmem:[#allocation2 + $0x38] sm:$0xff]
      %v760 = vld [vmem:[#allocation2 + $0x40] sm:$0xff]
      %v761 = vld [vmem:[#allocation2 + $0x48] sm:$0xff]
      %v762 = vld [vmem:[#allocation2 + $0x50] sm:$0xff]
      %v763 = vld [vmem:[#allocation2 + $0x58] sm:$0xff]
      %v764 = vld [vmem:[#allocation2 + $0x60] sm:$0xff]
      %v765 = vld [vmem:[#allocation2 + $0x68] sm:$0xff]
      %v766 = vld [vmem:[#allocation2 + $0x70] sm:$0xff]
      %v767 = vld [vmem:[#allocation2 + $0x78] sm:$0xff]
      %v768 = vld [vmem:[#allocation2 + $0x80] sm:$0xff]
      %v769 = vld [vmem:[#allocation2 + $0x88] sm:$0xff]
      %v770 = vld [vmem:[#allocation2 + $0x90] sm:$0xff]
      %v771 = vld [vmem:[#allocation2 + $0x98] sm:$0xff]
      %v772 = vld [vmem:[#allocation2 + $0xa0] sm:$0xff]
      %v773 = vld [vmem:[#allocation2 + $0xa8] sm:$0xff]
      %v774 = vld [vmem:[#allocation2 + $0xb0] sm:$0xff]
      %v775 = vld [vmem:[#allocation2 + $0xb8] sm:$0xff]
      %v776 = vld [vmem:[#allocation2 + $0xc0] sm:$0xff]
      %v777 = vld [vmem:[#allocation2 + $0xc8] sm:$0xff]
      %v778 = vld [vmem:[#allocation2 + $0xd0] sm:$0xff]
      %v779 = vld [vmem:[#allocation2 + $0xd8] sm:$0xff]
      %v780 = vld [vmem:[#allocation2 + $0xe0] sm:$0xff]
      %v781 = vld [vmem:[#allocation2 + $0xe8] sm:$0xff]
      %v782 = vld [vmem:[#allocation2 + $0xf0] sm:$0xff]
      %v783 = vld [vmem:[#allocation2 + $0xf8] sm:$0xff]
      %v784 = vld [vmem:[#allocation2 + $0x100] sm:$0xff]
      %v785 = vld [vmem:[#allocation2 + $0x108] sm:$0xff]
      %v786 = vld [vmem:[#allocation2 + $0x110] sm:$0xff]
      %v787 = vld [vmem:[#allocation2 + $0x118] sm:$0xff]
      %v788 = vld [vmem:[#allocation2 + $0x120] sm:$0x1]
      %v789 = vld [vmem:[#allocation2 + $0x128] sm:$0x1]
      %v790 = vld [vmem:[#allocation2 + $0x130] sm:$0x1]
      %v791 = vld [vmem:[#allocation2 + $0x138] sm:$0x1]
      %v792 = vpack.c.bf16 %v756, %v752
      %v793 = vpack.c.bf16 %v757, %v753
      %v794 = vpack.c.bf16 %v758, %v754
      %v795 = vpack.c.bf16 %v759, %v755
      %v796 = vpack.c.bf16 %v764, %v760
      %v797 = vpack.c.bf16 %v765, %v761
      %v798 = vpack.c.bf16 %v766, %v762
      %v799 = vpack.c.bf16 %v767, %v763
      %v800 = vpack.c.bf16 %v772, %v768
      %v801 = vpack.c.bf16 %v773, %v769
      %v802 = vpack.c.bf16 %v774, %v770
      %v803 = vpack.c.bf16 %v775, %v771
      %v804 = vpack.c.bf16 %v780, %v776
      %v805 = vpack.c.bf16 %v781, %v777
      %v806 = vpack.c.bf16 %v782, %v778
      %v807 = vpack.c.bf16 %v783, %v779
      %v808 = vpack.c.bf16 %v788, %v784
      %v809 = vpack.c.bf16 %v789, %v785
      %v810 = vpack.c.bf16 %v790, %v786
      %v811 = vpack.c.bf16 %v791, %v787
      %v814 = vunpack.c.l.b16 %v750
      %v815 = vunpack.c.l.b16 %v751
      %v816 = vpack.c.b16 %v815, %v814
      %v818 = vsel %vm476, %v816, 0
      %v821 = vand.u32 %v808, %v483
      %v824 = vand.u32 %v809, %v483
      %v827 = vand.u32 %v810, %v483
      %v830 = vand.u32 %v811, %v483
      %832 = vmatprep.subr.bf16.mxu0 %v793
      %833 = vmatpush1.bf16.msra.mxu0 %v792
      %834 = vmatprep.subr.bf16.mxu0 %v797
      %835 = vmatpush1.bf16.msra.mxu0 %v796
      %836 = vmatprep.subr.bf16.mxu0 %v801
      %837 = vmatpush1.bf16.msra.mxu0 %v800
      %838 = vmatprep.subr.bf16.mxu0 %v805
      %839 = vmatpush1.bf16.msra.mxu0 %v804
      %840 = vmatprep.subr.bf16.mxu0 %v824
      %841 = vmatpush1.bf16.msra.mxu0 %v821
      %842 = vmatprep.subr.bf16.mxu0 0
      %843 = vmatpush1.bf16.msra.mxu0 0
      %844 = vmatprep.subr.bf16.mxu0 0
      %845 = vmatpush1.bf16.msra.mxu0 0
      %846 = vmatprep.subr.bf16.mxu0 0
      %847 = vmatpush1.bf16.msra.mxu0 0
      %848 = vmatprep.subr.bf16.mxu0 0
      %849 = vmatpush1.bf16.msra.mxu0 0
      %850 = vmatprep.subr.bf16.mxu0 0
      %851 = vmatpush1.bf16.msra.mxu0 0
      %852 = vmatprep.subr.bf16.mxu0 0
      %853 = vmatpush1.bf16.msra.mxu0 0
      %854 = vmatprep.subr.bf16.mxu0 0
      %855 = vmatpush1.bf16.msra.mxu0 0
      %856 = vmatprep.subr.bf16.mxu0 0
      %857 = vmatpush1.bf16.msra.mxu0 0
      %858 = vmatprep.subr.bf16.mxu0 0
      %859 = vmatpush1.bf16.msra.mxu0 0
      %860 = vmatprep.subr.bf16.mxu0 0
      %861 = vmatpush1.bf16.msra.mxu0 0
      %862 = vmatprep.subr.bf16.mxu0 0
      %863 = vmatpush1.bf16.msra.mxu0 0
      %864 = vmatprep.mubr.bf16.mxu0 0
      %865 = vmatmul.mubr.bf16.gmra.mrb[0].mxu0 %v818
      %v866 = vpop.f32.mrb[0].mxu0
      %v867 = vadd.f32 0.0, %v866
      %v868 = vpop.f32.mrb[0].mxu0
      %v869 = vadd.f32 0.0, %v868
      %v870 = vpop.f32.mrb[0].mxu0
      %v871 = vadd.f32 0.0, %v870
      %v872 = vpop.f32.mrb[0].mxu0
      %v873 = vadd.f32 0.0, %v872
      %874 = vdwg.mxu0
      %875 = vmatprep.subr.bf16.mxu0 %v795
      %876 = vmatpush1.bf16.msra.mxu0 %v794
      %877 = vmatprep.subr.bf16.mxu0 %v799
      %878 = vmatpush1.bf16.msra.mxu0 %v798
      %879 = vmatprep.subr.bf16.mxu0 %v803
      %880 = vmatpush1.bf16.msra.mxu0 %v802
      %881 = vmatprep.subr.bf16.mxu0 %v807
      %882 = vmatpush1.bf16.msra.mxu0 %v806
      %883 = vmatprep.subr.bf16.mxu0 %v830
      %884 = vmatpush1.bf16.msra.mxu0 %v827
      %885 = vmatprep.subr.bf16.mxu0 0
      %886 = vmatpush1.bf16.msra.mxu0 0
      %887 = vmatprep.subr.bf16.mxu0 0
      %888 = vmatpush1.bf16.msra.mxu0 0
      %889 = vmatprep.subr.bf16.mxu0 0
      %890 = vmatpush1.bf16.msra.mxu0 0
      %891 = vmatprep.subr.bf16.mxu0 0
      %892 = vmatpush1.bf16.msra.mxu0 0
      %893 = vmatprep.subr.bf16.mxu0 0
      %894 = vmatpush1.bf16.msra.mxu0 0
      %895 = vmatprep.subr.bf16.mxu0 0
      %896 = vmatpush1.bf16.msra.mxu0 0
      %897 = vmatprep.subr.bf16.mxu0 0
      %898 = vmatpush1.bf16.msra.mxu0 0
      %899 = vmatprep.subr.bf16.mxu0 0
      %900 = vmatpush1.bf16.msra.mxu0 0
      %901 = vmatprep.subr.bf16.mxu0 0
      %902 = vmatpush1.bf16.msra.mxu0 0
      %903 = vmatprep.subr.bf16.mxu0 0
      %904 = vmatpush1.bf16.msra.mxu0 0
      %905 = vmatprep.subr.bf16.mxu0 0
      %906 = vmatpush1.bf16.msra.mxu0 0
      %907 = vmatprep.mubr.bf16.mxu0 0
      %908 = vmatmul.mubr.bf16.gmra.mrb[0].mxu0 %v818
      %v909 = vpop.f32.mrb[0].mxu0
      %v910 = vadd.f32 0.0, %v909
      %v911 = vpop.f32.mrb[0].mxu0
      %v912 = vadd.f32 0.0, %v911
      %v913 = vpop.f32.mrb[0].mxu0
      %v914 = vadd.f32 0.0, %v913
      %v915 = vpop.f32.mrb[0].mxu0
      %v916 = vadd.f32 0.0, %v915
      %917 = vdwg.mxu0
      %v918 = vmax.f32 %v867, %v871
      %v919 = vmax.f32 %v869, %v873
      %v920 = vmax.f32 %v910, %v914
      %v921 = vmax.f32 %v912, %v916
      %v922 = vadd.f32 %v918, %v230
      %v923 = vadd.f32 %v919, %v231
      %924 = vst [vmem:[%s204] sm:$0xff] %v922
      %925 = vst [vmem:[%s204 + $0x8] sm:$0xff] %v923
      %v926 = vadd.f32 %v920, %v233
      %v927 = vadd.f32 %v921, %v234
      %s928 = scalar_lea.vmem %s204, 16
      %929 = vst [vmem:[%s928] sm:$0xff] %v926
      %930 = vst [vmem:[%s928 + $0x8] sm:$0xff] %v927
      %s931 = smul.u32 2, %s15
      %p932 = scmp.lt.s32.totalorder %s931, 3
      %s933 = scalar_select %p932, %s931, 3
      %s934 = smul.addr %s933, 2
      %s935 = smul.addr %s934, 8
      %s936 = scalar_lea.vmem %s4, %s935
      // Predicated region
      $region37: #{resblock_forward.1} parent=35 // pred_check
        %p937 = pneg %p122
      $region38: #{resblock_forward.1} parent=35 // pred_check_branch
        %939 = sbr.rel (%p937) target = $region40
      $region39: #{resblock_forward.1} parent=35 // pred_region
        %s940 = smul.u32 2, %s15
      $region40: #{resblock_forward.1} parent=35 // pred_fallthru
        _
    $region36: #{resblock_forward.1} parent=5 // pred_fallthru
      _
    %p941 = scmp.le.s32.totalorder 2, %s10
    // Predicated region
    $region41: #{resblock_forward.1} parent=5 // pred_check
      %p942 = pneg %p941
    $region42: #{resblock_forward.1} parent=5 // pred_check_branch
      %944 = sbr.rel (%p942) target = $region44
    $region43: #{resblock_forward.1} parent=5 // pred_region
      %s945 = ssub.s32 %s10, 2
      // Predicated region
      $region45: #{resblock_forward.1} parent=43 // pred_check
        %p946 = pneg %p128
      $region46: #{resblock_forward.1} parent=43 // pred_check_branch
        %948 = sbr.rel (%p946) target = $region48
      $region47: #{resblock_forward.1} parent=43 // pred_region
        %s949 = smul.u32 2, %s16
        %p950 = scmp.lt.s32.totalorder %s949, 3
        %s951 = scalar_select %p950, %s949, 3
        %s952 = smul.addr %s951, 2
        %s953 = smul.addr %s952, 8
        %s954 = scalar_lea.vmem %s4, %s953
      $region48: #{resblock_forward.1} parent=43 // pred_fallthru
        _
    $region44: #{resblock_forward.1} parent=5 // pred_fallthru
      _
  $region6: #{resblock_forward.1} parent=0 // loop_footer
    %s14 = sadd.s32 1, %s10
  $region7: #{resblock_forward.1} parent=0 // loop_footer_branch
    %9 = sbr.rel target = $region3
  $region8: #{resblock_forward.1} parent=0 // loop_exit
    _

</llo_original>
